<compile_context>
chip_gen: v7x
topology: tpu7x:2x2x1
jax: 0.10.0
libtpu: 0.0.40
codegen_flags: <defaults>
</compile_context>

<pallas_src>
import functools
import math

import jax
import jax.numpy as jnp
from jax import lax
from jax.experimental import pallas as pl
from jax.experimental.pallas import tpu as pltpu


# ----------------------------------------------------------------------------
# Fused kernel: one batch element per grid step, all heads inside the block.
# ----------------------------------------------------------------------------
def _fused_attention_kernel(x_ref, wqkv_ref, bqkv_ref, wproj_ref, bproj_ref,
                            bias_ref, o_ref, k_out_ref, v_out_ref,
                            *, num_heads, scale):
    S = x_ref.shape[1]
    E = x_ref.shape[2]
    Dh = E // num_heads

    x = x_ref[0]                                               # (S, E)

    # ---- c_attn (Conv1D): qkv = x @ Wqkv + bqkv --------------------------- #
    qkv = jnp.dot(x, wqkv_ref[...], preferred_element_type=jnp.float32)
    qkv = qkv + bqkv_ref[...]                                  # (S, 3E) f32

    q = qkv[:, 0 * E:1 * E] * jnp.float32(scale)               # fold 1/sqrt(Dh)
    k = qkv[:, 1 * E:2 * E]
    v = qkv[:, 2 * E:3 * E]

    # present (use_cache) K/V in [S, E] layout; head-split happens outside.
    k_out_ref[0] = k.astype(k_out_ref.dtype)
    v_out_ref[0] = v.astype(v_out_ref.dtype)

    bias = bias_ref[...]                                       # (S, S) additive

    # ---- per-head attention fused with c_proj ----------------------------- #
    # merged @ Wproj == sum_h attn_out_h @ Wproj[h*Dh:(h+1)*Dh, :]
    acc = jnp.zeros((S, E), dtype=jnp.float32)
    for h in range(num_heads):                                 # static loop (small H)
        sl = slice(h * Dh, (h + 1) * Dh)
        qh, kh, vh = q[:, sl], k[:, sl], v[:, sl]
        # QK^T: contract last dims directly on the MXU (no explicit transpose).
        scores = lax.dot_general(qh, kh, (((1,), (1,)), ((), ())),
                                 preferred_element_type=jnp.float32)
        scores = scores + bias                                 # causal mask
        m = jnp.max(scores, axis=-1, keepdims=True)
        p = jnp.exp(scores - m)
        denom = jnp.sum(p, axis=-1, keepdims=True)
        probs = p * pl.reciprocal(denom, approx=True)          # EUP vrcp
        oh = jnp.dot(probs, vh, preferred_element_type=jnp.float32)     # (S, Dh)
        acc = acc + jnp.dot(oh, wproj_ref[sl, :],
                            preferred_element_type=jnp.float32)         # (S, E)

    o_ref[0] = (acc + bproj_ref[...]).astype(o_ref.dtype)


# ----------------------------------------------------------------------------
# Module-level forward (self-attention path, layer_past=None)
# ----------------------------------------------------------------------------
def mygpt2_attention_forward(hidden_states, params, *, num_heads,
                             self_attn_length=0, scale_attn_weights=True,
                             scale_attn_by_inverse_layer_idx=False,
                             layer_idx=None, use_cache=True):
    B, S, E = hidden_states.shape
    H = num_heads
    Dh = E // H

    scale = 1.0 / math.sqrt(Dh) if scale_attn_weights else 1.0
    if scale_attn_by_inverse_layer_idx:
        scale = scale / float(layer_idx + 1)

    # Additive causal bias (0 / finfo.min); bidirectional prefix of length
    # `self_attn_length`.  Depends only on static shapes -> constant-folded.
    row = jnp.arange(S, dtype=jnp.int32)[:, None]
    col = jnp.arange(S, dtype=jnp.int32)[None, :]
    causal = col <= row
    if self_attn_length != 0:
        causal = causal | ((row < self_attn_length) & (col < self_attn_length))
    bias = jnp.where(causal, 0.0, jnp.finfo(jnp.float32).min).astype(jnp.float32)

    wqkv = params["c_attn_w"]                       # (E, 3E)  Conv1D weight
    bqkv = params["c_attn_b"].reshape(1, 3 * E)
    wproj = params["c_proj_w"]                      # (E, E)
    bproj = params["c_proj_b"].reshape(1, E)

    kernel = functools.partial(_fused_attention_kernel, num_heads=H, scale=scale)

    out, k_lin, v_lin = pl.pallas_call(
        kernel,
        out_shape=(
            jax.ShapeDtypeStruct((B, S, E), hidden_states.dtype),
            jax.ShapeDtypeStruct((B, S, E), hidden_states.dtype),
            jax.ShapeDtypeStruct((B, S, E), hidden_states.dtype),
        ),
        grid_spec=pltpu.PrefetchScalarGridSpec(
            num_scalar_prefetch=0,
            grid=(B,),
            in_specs=[
                pl.BlockSpec((1, S, E), lambda b: (b, 0, 0)),        # x
                pl.BlockSpec((E, 3 * E), lambda b: (0, 0)),          # Wqkv
                pl.BlockSpec((1, 3 * E), lambda b: (0, 0)),          # bqkv
                pl.BlockSpec((E, E), lambda b: (0, 0)),              # Wproj
                pl.BlockSpec((1, E), lambda b: (0, 0)),              # bproj
                pl.BlockSpec((S, S), lambda b: (0, 0)),              # mask bias
            ],
            out_specs=(
                pl.BlockSpec((1, S, E), lambda b: (b, 0, 0)),        # attn out
                pl.BlockSpec((1, S, E), lambda b: (b, 0, 0)),        # k (pre-split)
                pl.BlockSpec((1, S, E), lambda b: (b, 0, 0)),        # v (pre-split)
            ),
        ),
        compiler_params=pltpu.CompilerParams(
            dimension_semantics=("parallel",),   # batch axis -> both TCs on v7x
        ),
    )(hidden_states, wqkv, bqkv, wproj, bproj, bias)

    if use_cache:
        def split_heads(t):   # (B, S, E) -> (B, H, S, Dh), matches GPT-2 `present`
            return t.reshape(B, S, H, Dh).transpose(0, 2, 1, 3)
        present = (split_heads(k_lin), split_heads(v_lin))
    else:
        present = None

    # TODO(synk): cross-attention (q_attn), layer_past KV concat,
    # attention_mask / head_mask, output_attentions and train-mode dropout
    # paths are not implemented (eval-mode self-attention only).
    return out, present


# ----------------------------------------------------------------------------
# Pure-JAX reference (correctness check)
# ----------------------------------------------------------------------------
def reference_forward(hidden_states, params, *, num_heads, self_attn_length=0):
    B, S, E = hidden_states.shape
    H, Dh = num_heads, E // num_heads
    x = hidden_states.reshape(B * S, E)
    qkv = x @ params["c_attn_w"] + params["c_attn_b"]
    q, k, v = jnp.split(qkv, 3, axis=-1)

    def sh(t):
        return t.reshape(B, S, H, Dh).transpose(0, 2, 1, 3)

    qh, kh, vh = sh(q), sh(k), sh(v)
    scores = jnp.einsum("bhqd,bhkd->bhqk", qh, kh) / math.sqrt(Dh)
    row = jnp.arange(S)[:, None]
    col = jnp.arange(S)[None, :]
    causal = col <= row
    if self_attn_length != 0:
        causal = causal | ((row < self_attn_length) & (col < self_attn_length))
    scores = jnp.where(causal[None, None], scores, jnp.finfo(jnp.float32).min)
    probs = jax.nn.softmax(scores, axis=-1)
    ao = jnp.einsum("bhqk,bhkd->bhqd", probs, vh)
    merged = ao.transpose(0, 2, 1, 3).reshape(B * S, E)
    out = merged @ params["c_proj_w"] + params["c_proj_b"]
    return out.reshape(B, S, E), (kh, vh)


# ----------------------------------------------------------------------------
if __name__ == "__main__":
    # Config: hidden_size=32, num_attention_heads=4 -> head_dim=8
    B, S, E, H = 2, 8, 32, 4

    key = jax.random.PRNGKey(0)
    k_x, k_aw, k_ab, k_pw, k_pb = jax.random.split(key, 5)

    hidden_states = jax.random.normal(k_x, (B, S, E), dtype=jnp.float32)

    # GPT-2 style init (std=0.02); Conv1D weights are (nx, nf)
    params = {
        "c_attn_w": 0.02 * jax.random.normal(k_aw, (E, 3 * E), dtype=jnp.float32),
        "c_attn_b": 0.02 * jax.random.normal(k_ab, (3 * E,), dtype=jnp.float32),
        "c_proj_w": 0.02 * jax.random.normal(k_pw, (E, E), dtype=jnp.float32),
        "c_proj_b": 0.02 * jax.random.normal(k_pb, (E,), dtype=jnp.float32),
    }

    for sal in (0, 3):   # pure-causal and bidirectional-prefix cases
        out, present = mygpt2_attention_forward(
            hidden_states, params, num_heads=H, self_attn_length=sal
        )
        out = jax.block_until_ready(out)
        jax.block_until_ready(present)

        ref_out, (ref_k, ref_v) = reference_forward(
            hidden_states, params, num_heads=H, self_attn_length=sal
        )
        assert out.shape == (B, S, E)
        assert present[0].shape == (B, H, S, E // H)
        assert jnp.allclose(out, ref_out, atol=2e-4, rtol=1e-3), \
            f"output mismatch vs reference (self_attn_length={sal})"
        assert jnp.allclose(present[0], ref_k, atol=1e-5, rtol=1e-4), "K cache mismatch"
        assert jnp.allclose(present[1], ref_v, atol=1e-5, rtol=1e-4), "V cache mismatch"

    print("KERNEL_OK")
</pallas_src>

<mosaic_0001>
module attributes {stable_mosaic.version = 11 : i64} {
  func.func @_fused_attention_kernel(%arg0: i32, %arg1: memref<1x8x32xf32, #tpu.memory_space<vmem>>, %arg2: memref<32x96xf32, #tpu.memory_space<vmem>>, %arg3: memref<1x96xf32, #tpu.memory_space<vmem>>, %arg4: memref<32x32xf32, #tpu.memory_space<vmem>>, %arg5: memref<1x32xf32, #tpu.memory_space<vmem>>, %arg6: memref<8x8xf32, #tpu.memory_space<vmem>>, %arg7: memref<1x8x32xf32, #tpu.memory_space<vmem>>, %arg8: memref<1x8x32xf32, #tpu.memory_space<vmem>>, %arg9: memref<1x8x32xf32, #tpu.memory_space<vmem>>) attributes {dimension_semantics = [#tpu.dimension_semantics<parallel>], iteration_bounds = array<i64: 2>, scalar_prefetch = 0 : i64, scratch_operands = 0 : i64, tpu.core_type = #tpu.core_type<tc>, window_params = [{transform_indices = @transform_0, window_bounds = array<i64: 1, 8, 32>}, {pipeline_mode = #tpu.pipeline_mode<synchronous>, transform_indices = @transform_1, window_bounds = array<i64: 32, 96>}, {pipeline_mode = #tpu.pipeline_mode<synchronous>, transform_indices = @transform_2, window_bounds = array<i64: 1, 96>}, {pipeline_mode = #tpu.pipeline_mode<synchronous>, transform_indices = @transform_3, window_bounds = array<i64: 32, 32>}, {pipeline_mode = #tpu.pipeline_mode<synchronous>, transform_indices = @transform_4, window_bounds = array<i64: 1, 32>}, {pipeline_mode = #tpu.pipeline_mode<synchronous>, transform_indices = @transform_5, window_bounds = array<i64: 8, 8>}, {transform_indices = @transform_6, window_bounds = array<i64: 1, 8, 32>}, {transform_indices = @transform_7, window_bounds = array<i64: 1, 8, 32>}, {transform_indices = @transform_8, window_bounds = array<i64: 1, 8, 32>}]} {
    %c0 = arith.constant 0 : index
    %c0_0 = arith.constant 0 : index
    %c0_1 = arith.constant 0 : index
    %0 = vector.load %arg1[%c0, %c0_0, %c0_1] : memref<1x8x32xf32, #tpu.memory_space<vmem>>, vector<1x8x32xf32>
    %1 = vector.shape_cast %0 : vector<1x8x32xf32> to vector<8x32xf32>
    %c0_2 = arith.constant 0 : index
    %c0_3 = arith.constant 0 : index
    %2 = vector.load %arg2[%c0_2, %c0_3] : memref<32x96xf32, #tpu.memory_space<vmem>>, vector<32x96xf32>
    %cst = arith.constant dense<0.000000e+00> : vector<8x96xf32>
    %3 = tpu.matmul %1, %2, %cst {dimension_numbers = #tpu.dot_dimension_numbers<[1], [0], [0], [1], [0, 0, 1, 1], [], []>} : vector<8x32xf32>, vector<32x96xf32>, vector<8x96xf32> -> vector<8x96xf32>
    %c0_4 = arith.constant 0 : index
    %c0_5 = arith.constant 0 : index
    %4 = vector.load %arg3[%c0_4, %c0_5] : memref<1x96xf32, #tpu.memory_space<vmem>>, vector<1x96xf32>
    %5 = vector.broadcast %4 : vector<1x96xf32> to vector<8x96xf32>
    %6 = arith.addf %3, %5 : vector<8x96xf32>
    %7 = vector.extract_strided_slice %6 {offsets = [0, 0], sizes = [8, 32], strides = [1, 1]} : vector<8x96xf32> to vector<8x32xf32>
    %cst_6 = arith.constant 0.353553385 : f32
    %8 = vector.broadcast %cst_6 : f32 to vector<8x32xf32>
    %9 = arith.mulf %7, %8 : vector<8x32xf32>
    %10 = vector.extract_strided_slice %6 {offsets = [0, 32], sizes = [8, 32], strides = [1, 1]} : vector<8x96xf32> to vector<8x32xf32>
    %11 = vector.extract_strided_slice %6 {offsets = [0, 64], sizes = [8, 32], strides = [1, 1]} : vector<8x96xf32> to vector<8x32xf32>
    %c0_7 = arith.constant 0 : index
    %c0_8 = arith.constant 0 : index
    %c0_9 = arith.constant 0 : index
    %12 = vector.load %arg8[%c0_7, %c0_8, %c0_9] : memref<1x8x32xf32, #tpu.memory_space<vmem>>, vector<1x8x32xf32>
    %13 = vector.shape_cast %12 : vector<1x8x32xf32> to vector<8x32xf32>
    %14 = vector.shape_cast %10 : vector<8x32xf32> to vector<1x8x32xf32>
    tpu.vector_store %arg8[%c0_7, %c0_8, %c0_9], %14 {strides = array<i32>} : memref<1x8x32xf32, #tpu.memory_space<vmem>>, vector<1x8x32xf32>,
    %c0_10 = arith.constant 0 : index
    %c0_11 = arith.constant 0 : index
    %c0_12 = arith.constant 0 : index
    %15 = vector.load %arg9[%c0_10, %c0_11, %c0_12] : memref<1x8x32xf32, #tpu.memory_space<vmem>>, vector<1x8x32xf32>
    %16 = vector.shape_cast %15 : vector<1x8x32xf32> to vector<8x32xf32>
    %17 = vector.shape_cast %11 : vector<8x32xf32> to vector<1x8x32xf32>
    tpu.vector_store %arg9[%c0_10, %c0_11, %c0_12], %17 {strides = array<i32>} : memref<1x8x32xf32, #tpu.memory_space<vmem>>, vector<1x8x32xf32>,
    %c0_13 = arith.constant 0 : index
    %c0_14 = arith.constant 0 : index
    %18 = vector.load %arg6[%c0_13, %c0_14] : memref<8x8xf32, #tpu.memory_space<vmem>>, vector<8x8xf32>
    %cst_15 = arith.constant 0.000000e+00 : f32
    %19 = vector.broadcast %cst_15 : f32 to vector<8x32xf32>
    %20 = vector.extract_strided_slice %9 {offsets = [0, 0], sizes = [8, 8], strides = [1, 1]} : vector<8x32xf32> to vector<8x8xf32>
    %21 = vector.extract_strided_slice %10 {offsets = [0, 0], sizes = [8, 8], strides = [1, 1]} : vector<8x32xf32> to vector<8x8xf32>
    %22 = vector.extract_strided_slice %11 {offsets = [0, 0], sizes = [8, 8], strides = [1, 1]} : vector<8x32xf32> to vector<8x8xf32>
    %cst_16 = arith.constant dense<0.000000e+00> : vector<8x8xf32>
    %23 = tpu.matmul %20, %21, %cst_16 {dimension_numbers = #tpu.dot_dimension_numbers<[1], [1], [0], [0], [0, 0, 1, 0], [], []>} : vector<8x8xf32>, vector<8x8xf32>, vector<8x8xf32> -> vector<8x8xf32>
    %24 = arith.addf %23, %18 : vector<8x8xf32>
    %cst_17 = arith.constant dense<0xFF800000> : vector<8xf32>
    %25 = vector.multi_reduction <maximumf>, %24, %cst_17 [1] : vector<8x8xf32> to vector<8xf32>
    %26 = vector.shape_cast %25 : vector<8xf32> to vector<8x1xf32>
    %27 = vector.broadcast %26 : vector<8x1xf32> to vector<8x8xf32>
    %28 = arith.subf %24, %27 : vector<8x8xf32>
    %29 = math.exp %28 : vector<8x8xf32>
    %cst_18 = arith.constant dense<0.000000e+00> : vector<8xf32>
    %30 = vector.multi_reduction <add>, %29, %cst_18 [1] : vector<8x8xf32> to vector<8xf32>
    %31 = vector.shape_cast %30 : vector<8xf32> to vector<8x1xf32>
    %32 = tpu.reciprocal %31 {approx = true} : vector<8x1xf32> -> vector<8x1xf32>
    %33 = vector.broadcast %32 : vector<8x1xf32> to vector<8x8xf32>
    %34 = arith.mulf %29, %33 : vector<8x8xf32>
    %cst_19 = arith.constant dense<0.000000e+00> : vector<8x8xf32>
    %35 = tpu.matmul %34, %22, %cst_19 {dimension_numbers = #tpu.dot_dimension_numbers<[1], [0], [0], [1], [0, 0, 1, 1], [], []>} : vector<8x8xf32>, vector<8x8xf32>, vector<8x8xf32> -> vector<8x8xf32>
    %c0_20 = arith.constant 0 : index
    %c0_21 = arith.constant 0 : index
    %36 = vector.load %arg4[%c0_20, %c0_21] : memref<32x32xf32, #tpu.memory_space<vmem>>, vector<8x32xf32>
    %cst_22 = arith.constant dense<0.000000e+00> : vector<8x32xf32>
    %37 = tpu.matmul %35, %36, %cst_22 {dimension_numbers = #tpu.dot_dimension_numbers<[1], [0], [0], [1], [0, 0, 1, 1], [], []>} : vector<8x8xf32>, vector<8x32xf32>, vector<8x32xf32> -> vector<8x32xf32>
    %38 = arith.addf %19, %37 : vector<8x32xf32>
    %39 = vector.extract_strided_slice %9 {offsets = [0, 8], sizes = [8, 8], strides = [1, 1]} : vector<8x32xf32> to vector<8x8xf32>
    %40 = vector.extract_strided_slice %10 {offsets = [0, 8], sizes = [8, 8], strides = [1, 1]} : vector<8x32xf32> to vector<8x8xf32>
    %41 = vector.extract_strided_slice %11 {offsets = [0, 8], sizes = [8, 8], strides = [1, 1]} : vector<8x32xf32> to vector<8x8xf32>
    %cst_23 = arith.constant dense<0.000000e+00> : vector<8x8xf32>
    %42 = tpu.matmul %39, %40, %cst_23 {dimension_numbers = #tpu.dot_dimension_numbers<[1], [1], [0], [0], [0, 0, 1, 0], [], []>} : vector<8x8xf32>, vector<8x8xf32>, vector<8x8xf32> -> vector<8x8xf32>
    %43 = arith.addf %42, %18 : vector<8x8xf32>
    %cst_24 = arith.constant dense<0xFF800000> : vector<8xf32>
    %44 = vector.multi_reduction <maximumf>, %43, %cst_24 [1] : vector<8x8xf32> to vector<8xf32>
    %45 = vector.shape_cast %44 : vector<8xf32> to vector<8x1xf32>
    %46 = vector.broadcast %45 : vector<8x1xf32> to vector<8x8xf32>
    %47 = arith.subf %43, %46 : vector<8x8xf32>
    %48 = math.exp %47 : vector<8x8xf32>
    %cst_25 = arith.constant dense<0.000000e+00> : vector<8xf32>
    %49 = vector.multi_reduction <add>, %48, %cst_25 [1] : vector<8x8xf32> to vector<8xf32>
    %50 = vector.shape_cast %49 : vector<8xf32> to vector<8x1xf32>
    %51 = tpu.reciprocal %50 {approx = true} : vector<8x1xf32> -> vector<8x1xf32>
    %52 = vector.broadcast %51 : vector<8x1xf32> to vector<8x8xf32>
    %53 = arith.mulf %48, %52 : vector<8x8xf32>
    %cst_26 = arith.constant dense<0.000000e+00> : vector<8x8xf32>
    %54 = tpu.matmul %53, %41, %cst_26 {dimension_numbers = #tpu.dot_dimension_numbers<[1], [0], [0], [1], [0, 0, 1, 1], [], []>} : vector<8x8xf32>, vector<8x8xf32>, vector<8x8xf32> -> vector<8x8xf32>
    %c8 = arith.constant 8 : index
    %c0_27 = arith.constant 0 : index
    %55 = vector.load %arg4[%c8, %c0_27] : memref<32x32xf32, #tpu.memory_space<vmem>>, vector<8x32xf32>
    %cst_28 = arith.constant dense<0.000000e+00> : vector<8x32xf32>
    %56 = tpu.matmul %54, %55, %cst_28 {dimension_numbers = #tpu.dot_dimension_numbers<[1], [0], [0], [1], [0, 0, 1, 1], [], []>} : vector<8x8xf32>, vector<8x32xf32>, vector<8x32xf32> -> vector<8x32xf32>
    %57 = arith.addf %38, %56 : vector<8x32xf32>
    %58 = vector.extract_strided_slice %9 {offsets = [0, 16], sizes = [8, 8], strides = [1, 1]} : vector<8x32xf32> to vector<8x8xf32>
    %59 = vector.extract_strided_slice %10 {offsets = [0, 16], sizes = [8, 8], strides = [1, 1]} : vector<8x32xf32> to vector<8x8xf32>
    %60 = vector.extract_strided_slice %11 {offsets = [0, 16], sizes = [8, 8], strides = [1, 1]} : vector<8x32xf32> to vector<8x8xf32>
    %cst_29 = arith.constant dense<0.000000e+00> : vector<8x8xf32>
    %61 = tpu.matmul %58, %59, %cst_29 {dimension_numbers = #tpu.dot_dimension_numbers<[1], [1], [0], [0], [0, 0, 1, 0], [], []>} : vector<8x8xf32>, vector<8x8xf32>, vector<8x8xf32> -> vector<8x8xf32>
    %62 = arith.addf %61, %18 : vector<8x8xf32>
    %cst_30 = arith.constant dense<0xFF800000> : vector<8xf32>
    %63 = vector.multi_reduction <maximumf>, %62, %cst_30 [1] : vector<8x8xf32> to vector<8xf32>
    %64 = vector.shape_cast %63 : vector<8xf32> to vector<8x1xf32>
    %65 = vector.broadcast %64 : vector<8x1xf32> to vector<8x8xf32>
    %66 = arith.subf %62, %65 : vector<8x8xf32>
    %67 = math.exp %66 : vector<8x8xf32>
    %cst_31 = arith.constant dense<0.000000e+00> : vector<8xf32>
    %68 = vector.multi_reduction <add>, %67, %cst_31 [1] : vector<8x8xf32> to vector<8xf32>
    %69 = vector.shape_cast %68 : vector<8xf32> to vector<8x1xf32>
    %70 = tpu.reciprocal %69 {approx = true} : vector<8x1xf32> -> vector<8x1xf32>
    %71 = vector.broadcast %70 : vector<8x1xf32> to vector<8x8xf32>
    %72 = arith.mulf %67, %71 : vector<8x8xf32>
    %cst_32 = arith.constant dense<0.000000e+00> : vector<8x8xf32>
    %73 = tpu.matmul %72, %60, %cst_32 {dimension_numbers = #tpu.dot_dimension_numbers<[1], [0], [0], [1], [0, 0, 1, 1], [], []>} : vector<8x8xf32>, vector<8x8xf32>, vector<8x8xf32> -> vector<8x8xf32>
    %c16 = arith.constant 16 : index
    %c0_33 = arith.constant 0 : index
    %74 = vector.load %arg4[%c16, %c0_33] : memref<32x32xf32, #tpu.memory_space<vmem>>, vector<8x32xf32>
    %cst_34 = arith.constant dense<0.000000e+00> : vector<8x32xf32>
    %75 = tpu.matmul %73, %74, %cst_34 {dimension_numbers = #tpu.dot_dimension_numbers<[1], [0], [0], [1], [0, 0, 1, 1], [], []>} : vector<8x8xf32>, vector<8x32xf32>, vector<8x32xf32> -> vector<8x32xf32>
    %76 = arith.addf %57, %75 : vector<8x32xf32>
    %77 = vector.extract_strided_slice %9 {offsets = [0, 24], sizes = [8, 8], strides = [1, 1]} : vector<8x32xf32> to vector<8x8xf32>
    %78 = vector.extract_strided_slice %10 {offsets = [0, 24], sizes = [8, 8], strides = [1, 1]} : vector<8x32xf32> to vector<8x8xf32>
    %79 = vector.extract_strided_slice %11 {offsets = [0, 24], sizes = [8, 8], strides = [1, 1]} : vector<8x32xf32> to vector<8x8xf32>
    %cst_35 = arith.constant dense<0.000000e+00> : vector<8x8xf32>
    %80 = tpu.matmul %77, %78, %cst_35 {dimension_numbers = #tpu.dot_dimension_numbers<[1], [1], [0], [0], [0, 0, 1, 0], [], []>} : vector<8x8xf32>, vector<8x8xf32>, vector<8x8xf32> -> vector<8x8xf32>
    %81 = arith.addf %80, %18 : vector<8x8xf32>
    %cst_36 = arith.constant dense<0xFF800000> : vector<8xf32>
    %82 = vector.multi_reduction <maximumf>, %81, %cst_36 [1] : vector<8x8xf32> to vector<8xf32>
    %83 = vector.shape_cast %82 : vector<8xf32> to vector<8x1xf32>
    %84 = vector.broadcast %83 : vector<8x1xf32> to vector<8x8xf32>
    %85 = arith.subf %81, %84 : vector<8x8xf32>
    %86 = math.exp %85 : vector<8x8xf32>
    %cst_37 = arith.constant dense<0.000000e+00> : vector<8xf32>
    %87 = vector.multi_reduction <add>, %86, %cst_37 [1] : vector<8x8xf32> to vector<8xf32>
    %88 = vector.shape_cast %87 : vector<8xf32> to vector<8x1xf32>
    %89 = tpu.reciprocal %88 {approx = true} : vector<8x1xf32> -> vector<8x1xf32>
    %90 = vector.broadcast %89 : vector<8x1xf32> to vector<8x8xf32>
    %91 = arith.mulf %86, %90 : vector<8x8xf32>
    %cst_38 = arith.constant dense<0.000000e+00> : vector<8x8xf32>
    %92 = tpu.matmul %91, %79, %cst_38 {dimension_numbers = #tpu.dot_dimension_numbers<[1], [0], [0], [1], [0, 0, 1, 1], [], []>} : vector<8x8xf32>, vector<8x8xf32>, vector<8x8xf32> -> vector<8x8xf32>
    %c24 = arith.constant 24 : index
    %c0_39 = arith.constant 0 : index
    %93 = vector.load %arg4[%c24, %c0_39] : memref<32x32xf32, #tpu.memory_space<vmem>>, vector<8x32xf32>
    %cst_40 = arith.constant dense<0.000000e+00> : vector<8x32xf32>
    %94 = tpu.matmul %92, %93, %cst_40 {dimension_numbers = #tpu.dot_dimension_numbers<[1], [0], [0], [1], [0, 0, 1, 1], [], []>} : vector<8x8xf32>, vector<8x32xf32>, vector<8x32xf32> -> vector<8x32xf32>
    %95 = arith.addf %76, %94 : vector<8x32xf32>
    %c0_41 = arith.constant 0 : index
    %c0_42 = arith.constant 0 : index
    %96 = vector.load %arg5[%c0_41, %c0_42] : memref<1x32xf32, #tpu.memory_space<vmem>>, vector<1x32xf32>
    %97 = vector.broadcast %96 : vector<1x32xf32> to vector<8x32xf32>
    %98 = arith.addf %95, %97 : vector<8x32xf32>
    %c0_43 = arith.constant 0 : index
    %c0_44 = arith.constant 0 : index
    %c0_45 = arith.constant 0 : index
    %99 = vector.load %arg7[%c0_43, %c0_44, %c0_45] : memref<1x8x32xf32, #tpu.memory_space<vmem>>, vector<1x8x32xf32>
    %100 = vector.shape_cast %99 : vector<1x8x32xf32> to vector<8x32xf32>
    %101 = vector.shape_cast %98 : vector<8x32xf32> to vector<1x8x32xf32>
    tpu.vector_store %arg7[%c0_43, %c0_44, %c0_45], %101 {strides = array<i32>} : memref<1x8x32xf32, #tpu.memory_space<vmem>>, vector<1x8x32xf32>,
    return
  }
  func.func @transform_0(%arg0: i32) -> (i32, i32, i32) {
    %c0_i32 = arith.constant 0 : i32
    %c0_i32_0 = arith.constant 0 : i32
    %c0_i32_1 = arith.constant 0 : i32
    return %arg0, %c0_i32, %c0_i32_0 : i32, i32, i32
  }
  func.func @transform_1(%arg0: i32) -> (i32, i32) {
    %c0_i32 = arith.constant 0 : i32
    %c0_i32_0 = arith.constant 0 : i32
    %c0_i32_1 = arith.constant 0 : i32
    return %c0_i32, %c0_i32_0 : i32, i32
  }
  func.func @transform_2(%arg0: i32) -> (i32, i32) {
    %c0_i32 = arith.constant 0 : i32
    %c0_i32_0 = arith.constant 0 : i32
    %c0_i32_1 = arith.constant 0 : i32
    return %c0_i32, %c0_i32_0 : i32, i32
  }
  func.func @transform_3(%arg0: i32) -> (i32, i32) {
    %c0_i32 = arith.constant 0 : i32
    %c0_i32_0 = arith.constant 0 : i32
    %c0_i32_1 = arith.constant 0 : i32
    return %c0_i32, %c0_i32_0 : i32, i32
  }
  func.func @transform_4(%arg0: i32) -> (i32, i32) {
    %c0_i32 = arith.constant 0 : i32
    %c0_i32_0 = arith.constant 0 : i32
    %c0_i32_1 = arith.constant 0 : i32
    return %c0_i32, %c0_i32_0 : i32, i32
  }
  func.func @transform_5(%arg0: i32) -> (i32, i32) {
    %c0_i32 = arith.constant 0 : i32
    %c0_i32_0 = arith.constant 0 : i32
    %c0_i32_1 = arith.constant 0 : i32
    return %c0_i32, %c0_i32_0 : i32, i32
  }
  func.func @transform_6(%arg0: i32) -> (i32, i32, i32) {
    %c0_i32 = arith.constant 0 : i32
    %c0_i32_0 = arith.constant 0 : i32
    %c0_i32_1 = arith.constant 0 : i32
    return %arg0, %c0_i32, %c0_i32_0 : i32, i32, i32
  }
  func.func @transform_7(%arg0: i32) -> (i32, i32, i32) {
    %c0_i32 = arith.constant 0 : i32
    %c0_i32_0 = arith.constant 0 : i32
    %c0_i32_1 = arith.constant 0 : i32
    return %arg0, %c0_i32, %c0_i32_0 : i32, i32, i32
  }
  func.func @transform_8(%arg0: i32) -> (i32, i32, i32) {
    %c0_i32 = arith.constant 0 : i32
    %c0_i32_0 = arith.constant 0 : i32
    %c0_i32_1 = arith.constant 0 : i32
    return %arg0, %c0_i32, %c0_i32_0 : i32, i32, i32
  }
}

</mosaic_0001>

<llo_original>
// kernel: tpu_custom_call.1
$region0: #{tpu_custom_call.1}
  #allocation0 [shape = 'u32[]', space=smem, size = 0x4, offset = 0x4, fixed_abs, tag = 'smem constant byte address 0x4 - core index']
  #allocation1 [shape = 'u32[144,128]{1,0:T(1,128)}', space=vmem, size = 0x12000, scoped, tag = 'internal scratch']
  %s0 = inlined_call_operand.hbm [shape: f32[2,8,32], index: 0, kind: input, shape index: {}]
  %s1 = inlined_call_operand.hbm [shape: f32[32,96], index: 1, kind: input, shape index: {}]
  %s2 = inlined_call_operand.vmem [shape: f32[1,96], index: 2, kind: input, shape index: {}]
  %s3 = inlined_call_operand.hbm [shape: f32[32,32], index: 3, kind: input, shape index: {}]
  %s4 = inlined_call_operand.vmem [shape: f32[1,32], index: 4, kind: input, shape index: {}]
  %s5 = inlined_call_operand.vmem [shape: f32[8,8], index: 5, kind: input, shape index: {}]
  %s6 = inlined_call_operand.hbm [shape: f32[2,8,32], index: 6, kind: output, shape index: {0}]
  %s7 = inlined_call_operand.hbm [shape: f32[2,8,32], index: 7, kind: output, shape index: {1}]
  %s8 = inlined_call_operand.hbm [shape: f32[2,8,32], index: 8, kind: output, shape index: {2}]
  %9 = xla_tuple %s6, %s7, %s8
  %s10 = sld [smem:[#allocation0]]
  $region85: #{tpu_custom_call.1} parent=0
    _
  %s12 = ssub.s32 1, %s10
  %s13 = scalar_select 0, %s12, %s10
  $region1: #{tpu_custom_call.1} parent=0
    #allocation2 [shape = 'u8[8192]{0}', space=vmem, size = 0x2000, scoped, tag = 'input window, operand 0']
    #allocation3 [shape = 's32[2]{0}', space=sflag, size = 0x8, scoped, tag = 'scoped memory for tpu_custom_call.1']
    #allocation4 [shape = 's32[2]{0}', space=sflag, size = 0x8, scoped, tag = 'scoped memory for tpu_custom_call.1']
    #allocation5 [shape = 'u8[16384]{0}', space=vmem, size = 0x4000, scoped, tag = 'input window, operand 1, single buffered']
    #allocation6 [shape = 's32[1]{0}', space=sflag, size = 0x4, scoped, tag = 'scoped memory for tpu_custom_call.1']
    #allocation7 [shape = 'u8[16384]{0}', space=vmem, size = 0x4000, scoped, tag = 'input window, operand 3, single buffered']
    #allocation8 [shape = 'u8[8192]{0}', space=vmem, size = 0x2000, scoped, tag = 'output window, operand 0']
    #allocation9 [shape = 'u8[8192]{0}', space=vmem, size = 0x2000, scoped, tag = 'output window, operand 1']
    #allocation10 [shape = 's32[2]{0}', space=sflag, size = 0x8, scoped, tag = 'scoped memory for tpu_custom_call.1']
    #allocation11 [shape = 'u8[8192]{0}', space=vmem, size = 0x2000, scoped, tag = 'output window, operand 2']
    %14 = vsyncpa [#allocation3], 0
    %s15 = scalar_lea.sflag [#allocation3], 1
    %16 = vsyncpa %s15, 0
    %17 = vsyncpa [#allocation6], 0
    %18 = vsyncpa [#allocation4], 0
    %s19 = scalar_lea.sflag [#allocation4], 1
    %20 = vsyncpa %s19, 0
    %21 = vsyncpa [#allocation10], 0
    %s22 = scalar_lea.sflag [#allocation10], 1
    %23 = vsyncpa %s22, 0
    loop: start=0, step=1, limit=4
    $region2: #{tpu_custom_call.1} parent=1 // loop_pre_header
      _
    $region3: #{tpu_custom_call.1} parent=1 // loop_header
      %s25 = sphi 0, %s29
      %p26 = scmp.ge.s32.totalorder %s25, 4
      %s35 = sphi 0, %s37
      %s38 = sphi 0, %s35
      %s39 = sphi 0, %s38
      %s55 = sphi 0, %s39
      %s59 = sphi 0, %s59
      %s61 = sphi 0, %s59
      %s62 = sphi 0, %s61
      %s76 = sphi 0, %s62
      %s80 = sphi 0, %s80
      %s82 = sphi 0, %s80
      %s83 = sphi 0, %s82
      %s97 = sphi 0, %s83
      %s101 = sphi 0, %s101
      %s103 = sphi 0, %s101
      %s104 = sphi 0, %s103
      %s118 = sphi 0, %s104
      %s122 = sphi 0, %s122
      %s124 = sphi 0, %s122
      %s125 = sphi 0, %s124
      %s139 = sphi 0, %s125
      %s143 = sphi 0, %s143
      %s145 = sphi 0, %s143
      %s146 = sphi 0, %s145
      %s160 = sphi 0, %s146
      %s166 = sphi 0, %s168
      %s169 = sphi 0, %s166
      %s170 = sphi 0, %s169
      %s186 = sphi 0, %s170
      %s192 = sphi 0, %s194
      %s195 = sphi 0, %s192
      %s196 = sphi 0, %s195
      %s212 = sphi 0, %s196
      %s218 = sphi 0, %s220
      %s221 = sphi 0, %s218
      %s222 = sphi 0, %s221
      %s238 = sphi 0, %s222
    $region4: #{tpu_custom_call.1} parent=1 // loop_header_branch
      %28 = sbr.rel (%p26) target = $region8
    $region5: #{tpu_custom_call.1} parent=1 // loop_body
      %s30 = ssub.s32 %s25, 1
      %s31 = ssub.s32 %s25, 2
      %s32 = sadd.s32 %s25, 1
      %s33 = ssub.s32 %s25, %s32
      %p34 = scmp.eq.s32.totalorder %s33, 0
      %s36 = sadd.s32 %s35, 1
      %s37 = scalar_select %p34, %s35, %s36
      %p40 = pneg %p34
      %p41 = scmp.eq.s32.totalorder %s25, 1
      %p42 = por %p40, %p41
      %p43 = scmp.ne.s32.totalorder %s35, %s38
      %p44 = scmp.eq.s32.totalorder %s25, 0
      %p45 = por %p43, %p44
      %p46 = scmp.ne.s32.totalorder %s35, %s38
      %p47 = scmp.eq.s32.totalorder %s30, 1
      %p48 = por %p46, %p47
      %p49 = scmp.ne.s32.totalorder %s38, %s39
      %p50 = scmp.eq.s32.totalorder %s30, 0
      %p51 = por %p49, %p50
      %p52 = scmp.ne.s32.totalorder %s38, %s39
      %p53 = scmp.eq.s32.totalorder %s31, 1
      %p54 = por %p52, %p53
      %p56 = scmp.ne.s32.totalorder %s39, %s55
      %p57 = scmp.eq.s32.totalorder %s31, 0
      %p58 = por %p56, %p57
      %s60 = sadd.s32 %s59, 1
      %p63 = scmp.eq.s32.totalorder %s25, 1
      %p64 = scmp.ne.s32.totalorder %s59, %s61
      %p65 = scmp.eq.s32.totalorder %s25, 0
      %p66 = por %p64, %p65
      %p67 = scmp.ne.s32.totalorder %s59, %s61
      %p68 = scmp.eq.s32.totalorder %s30, 1
      %p69 = por %p67, %p68
      %p70 = scmp.ne.s32.totalorder %s61, %s62
      %p71 = scmp.eq.s32.totalorder %s30, 0
      %p72 = por %p70, %p71
      %p73 = scmp.ne.s32.totalorder %s61, %s62
      %p74 = scmp.eq.s32.totalorder %s31, 1
      %p75 = por %p73, %p74
      %p77 = scmp.ne.s32.totalorder %s62, %s76
      %p78 = scmp.eq.s32.totalorder %s31, 0
      %p79 = por %p77, %p78
      %s81 = sadd.s32 %s80, 1
      %p84 = scmp.eq.s32.totalorder %s25, 1
      %p85 = scmp.ne.s32.totalorder %s80, %s82
      %p86 = scmp.eq.s32.totalorder %s25, 0
      %p87 = por %p85, %p86
      %p88 = scmp.ne.s32.totalorder %s80, %s82
      %p89 = scmp.eq.s32.totalorder %s30, 1
      %p90 = por %p88, %p89
      %p91 = scmp.ne.s32.totalorder %s82, %s83
      %p92 = scmp.eq.s32.totalorder %s30, 0
      %p93 = por %p91, %p92
      %p94 = scmp.ne.s32.totalorder %s82, %s83
      %p95 = scmp.eq.s32.totalorder %s31, 1
      %p96 = por %p94, %p95
      %p98 = scmp.ne.s32.totalorder %s83, %s97
      %p99 = scmp.eq.s32.totalorder %s31, 0
      %p100 = por %p98, %p99
      %s102 = sadd.s32 %s101, 1
      %p105 = scmp.eq.s32.totalorder %s25, 1
      %p106 = scmp.ne.s32.totalorder %s101, %s103
      %p107 = scmp.eq.s32.totalorder %s25, 0
      %p108 = por %p106, %p107
      %p109 = scmp.ne.s32.totalorder %s101, %s103
      %p110 = scmp.eq.s32.totalorder %s30, 1
      %p111 = por %p109, %p110
      %p112 = scmp.ne.s32.totalorder %s103, %s104
      %p113 = scmp.eq.s32.totalorder %s30, 0
      %p114 = por %p112, %p113
      %p115 = scmp.ne.s32.totalorder %s103, %s104
      %p116 = scmp.eq.s32.totalorder %s31, 1
      %p117 = por %p115, %p116
      %p119 = scmp.ne.s32.totalorder %s104, %s118
      %p120 = scmp.eq.s32.totalorder %s31, 0
      %p121 = por %p119, %p120
      %s123 = sadd.s32 %s122, 1
      %p126 = scmp.eq.s32.totalorder %s25, 1
      %p127 = scmp.ne.s32.totalorder %s122, %s124
      %p128 = scmp.eq.s32.totalorder %s25, 0
      %p129 = por %p127, %p128
      %p130 = scmp.ne.s32.totalorder %s122, %s124
      %p131 = scmp.eq.s32.totalorder %s30, 1
      %p132 = por %p130, %p131
      %p133 = scmp.ne.s32.totalorder %s124, %s125
      %p134 = scmp.eq.s32.totalorder %s30, 0
      %p135 = por %p133, %p134
      %p136 = scmp.ne.s32.totalorder %s124, %s125
      %p137 = scmp.eq.s32.totalorder %s31, 1
      %p138 = por %p136, %p137
      %p140 = scmp.ne.s32.totalorder %s125, %s139
      %p141 = scmp.eq.s32.totalorder %s31, 0
      %p142 = por %p140, %p141
      %s144 = sadd.s32 %s143, 1
      %p147 = scmp.eq.s32.totalorder %s25, 1
      %p148 = scmp.ne.s32.totalorder %s143, %s145
      %p149 = scmp.eq.s32.totalorder %s25, 0
      %p150 = por %p148, %p149
      %p151 = scmp.ne.s32.totalorder %s143, %s145
      %p152 = scmp.eq.s32.totalorder %s30, 1
      %p153 = por %p151, %p152
      %p154 = scmp.ne.s32.totalorder %s145, %s146
      %p155 = scmp.eq.s32.totalorder %s30, 0
      %p156 = por %p154, %p155
      %p157 = scmp.ne.s32.totalorder %s145, %s146
      %p158 = scmp.eq.s32.totalorder %s31, 1
      %p159 = por %p157, %p158
      %p161 = scmp.ne.s32.totalorder %s146, %s160
      %p162 = scmp.eq.s32.totalorder %s31, 0
      %p163 = por %p161, %p162
      %s164 = ssub.s32 %s25, %s32
      %p165 = scmp.eq.s32.totalorder %s164, 0
      %s167 = sadd.s32 %s166, 1
      %s168 = scalar_select %p165, %s166, %s167
      %p171 = pneg %p165
      %p172 = scmp.eq.s32.totalorder %s25, 1
      %p173 = por %p171, %p172
      %p174 = scmp.ne.s32.totalorder %s166, %s169
      %p175 = scmp.eq.s32.totalorder %s25, 0
      %p176 = por %p174, %p175
      %p177 = scmp.ne.s32.totalorder %s166, %s169
      %p178 = scmp.eq.s32.totalorder %s30, 1
      %p179 = por %p177, %p178
      %p180 = scmp.ne.s32.totalorder %s169, %s170
      %p181 = scmp.eq.s32.totalorder %s30, 0
      %p182 = por %p180, %p181
      %p183 = scmp.ne.s32.totalorder %s169, %s170
      %p184 = scmp.eq.s32.totalorder %s31, 1
      %p185 = por %p183, %p184
      %p187 = scmp.ne.s32.totalorder %s170, %s186
      %p188 = scmp.eq.s32.totalorder %s31, 0
      %p189 = por %p187, %p188
      %s190 = ssub.s32 %s25, %s32
      %p191 = scmp.eq.s32.totalorder %s190, 0
      %s193 = sadd.s32 %s192, 1
      %s194 = scalar_select %p191, %s192, %s193
      %p197 = pneg %p191
      %p198 = scmp.eq.s32.totalorder %s25, 1
      %p199 = por %p197, %p198
      %p200 = scmp.ne.s32.totalorder %s192, %s195
      %p201 = scmp.eq.s32.totalorder %s25, 0
      %p202 = por %p200, %p201
      %p203 = scmp.ne.s32.totalorder %s192, %s195
      %p204 = scmp.eq.s32.totalorder %s30, 1
      %p205 = por %p203, %p204
      %p206 = scmp.ne.s32.totalorder %s195, %s196
      %p207 = scmp.eq.s32.totalorder %s30, 0
      %p208 = por %p206, %p207
      %p209 = scmp.ne.s32.totalorder %s195, %s196
      %p210 = scmp.eq.s32.totalorder %s31, 1
      %p211 = por %p209, %p210
      %p213 = scmp.ne.s32.totalorder %s196, %s212
      %p214 = scmp.eq.s32.totalorder %s31, 0
      %p215 = por %p213, %p214
      %s216 = ssub.s32 %s25, %s32
      %p217 = scmp.eq.s32.totalorder %s216, 0
      %s219 = sadd.s32 %s218, 1
      %s220 = scalar_select %p217, %s218, %s219
      %p223 = pneg %p217
      %p224 = scmp.eq.s32.totalorder %s25, 1
      %p225 = por %p223, %p224
      %p226 = scmp.ne.s32.totalorder %s218, %s221
      %p227 = scmp.eq.s32.totalorder %s25, 0
      %p228 = por %p226, %p227
      %p229 = scmp.ne.s32.totalorder %s218, %s221
      %p230 = scmp.eq.s32.totalorder %s30, 1
      %p231 = por %p229, %p230
      %p232 = scmp.ne.s32.totalorder %s221, %s222
      %p233 = scmp.eq.s32.totalorder %s30, 0
      %p234 = por %p232, %p233
      %p235 = scmp.ne.s32.totalorder %s221, %s222
      %p236 = scmp.eq.s32.totalorder %s31, 1
      %p237 = por %p235, %p236
      %p239 = scmp.ne.s32.totalorder %s222, %s238
      %p240 = scmp.eq.s32.totalorder %s31, 0
      %p241 = por %p239, %p240
      %p242 = scmp.le.s32.totalorder 1, %s25
      %p243 = scmp.lt.s32.totalorder %s25, 3
      %p244 = pnand %p242, %p243
      %p245 = pneg %p244
      // Predicated region
      $region9: #{tpu_custom_call.1} parent=5 // pred_check
        _
      $region10: #{tpu_custom_call.1} parent=5 // pred_check_branch
        %247 = sbr.rel (%p244) target = $region12
      $region11: #{tpu_custom_call.1} parent=5 // pred_region
        %s248 = ssub.s32 %s25, 1
        // Predicated region
        $region13: #{tpu_custom_call.1} parent=11 // pred_check
          %p249 = pneg %p72
        $region14: #{tpu_custom_call.1} parent=11 // pred_check_branch
          %251 = sbr.rel (%p249) target = $region16
        $region15: #{tpu_custom_call.1} parent=11 // pred_region
          %s253 = ssub.s32 512, 512
          %254 = vsyncadd [#allocation6], %s253
          %s255 = sshll.u32 [#allocation5], 4
          %s256 = int_to_ptr.vmem [resolvable:$true] %s255
          %261 = dma.hbm_to_vmem [thread:$0]  %s1, 512, %s256, [#allocation6], 128, 128, 8
        $region16: #{tpu_custom_call.1} parent=11 // pred_fallthru
          _
        // Predicated region
        $region17: #{tpu_custom_call.1} parent=11 // pred_check
          %p262 = pneg %p93
        $region18: #{tpu_custom_call.1} parent=11 // pred_check_branch
          %264 = sbr.rel (%p262) target = $region20
        $region19: #{tpu_custom_call.1} parent=11 // pred_region
          _
        $region20: #{tpu_custom_call.1} parent=11 // pred_fallthru
          _
        // Predicated region
        $region21: #{tpu_custom_call.1} parent=11 // pred_check
          %p265 = pneg %p114
        $region22: #{tpu_custom_call.1} parent=11 // pred_check_branch
          %267 = sbr.rel (%p265) target = $region24
        $region23: #{tpu_custom_call.1} parent=11 // pred_region
          %s269 = ssub.s32 512, 512
          %270 = vsyncadd [#allocation6], %s269
          %s271 = sshll.u32 [#allocation7], 4
          %s272 = int_to_ptr.vmem [resolvable:$true] %s271
          %277 = dma.hbm_to_vmem [thread:$0]  %s3, 512, %s272, [#allocation6], 128, 128, 8
        $region24: #{tpu_custom_call.1} parent=11 // pred_fallthru
          _
        // Predicated region
        $region25: #{tpu_custom_call.1} parent=11 // pred_check
          %p278 = pneg %p135
        $region26: #{tpu_custom_call.1} parent=11 // pred_check_branch
          %280 = sbr.rel (%p278) target = $region28
        $region27: #{tpu_custom_call.1} parent=11 // pred_region
          _
        $region28: #{tpu_custom_call.1} parent=11 // pred_fallthru
          _
        // Predicated region
        $region29: #{tpu_custom_call.1} parent=11 // pred_check
          %p281 = pneg %p156
        $region30: #{tpu_custom_call.1} parent=11 // pred_check_branch
          %283 = sbr.rel (%p281) target = $region32
        $region31: #{tpu_custom_call.1} parent=11 // pred_region
          _
        $region32: #{tpu_custom_call.1} parent=11 // pred_fallthru
          _
      $region12: #{tpu_custom_call.1} parent=5 // pred_fallthru
        _
      %p284 = scmp.lt.s32.totalorder %s25, 2
      // Predicated region
      $region33: #{tpu_custom_call.1} parent=5 // pred_check
        %p285 = pneg %p284
      $region34: #{tpu_custom_call.1} parent=5 // pred_check_branch
        %287 = sbr.rel (%p285) target = $region36
      $region35: #{tpu_custom_call.1} parent=5 // pred_region
        // Predicated region
        $region37: #{tpu_custom_call.1} parent=35 // pred_check
          %p288 = pneg %p45
        $region38: #{tpu_custom_call.1} parent=35 // pred_check_branch
          %290 = sbr.rel (%p288) target = $region40
        $region39: #{tpu_custom_call.1} parent=35 // pred_region
          %s291 = sand.u32 %s35, 1
          %s292 = scalar_lea.sflag [#allocation3], %s291
          %s293 = sand.u32 %s35, 1
          %s294 = smul.addr %s293, 8
          %s295 = scalar_lea.vmem [#allocation2], %s294
          %s297 = ssub.s32 128, 128
          %298 = vsyncadd %s292, %s297
          %s299 = smul.addr %s25, 128
          %s300 = scalar_lea.hbm %s0, %s299
          %s302 = sshll.u32 %s295, 4
          %s303 = int_to_ptr.vmem [resolvable:$true] %s302
          %305 = dma.hbm_to_vmem [thread:$0]  %s300, 128, %s303, %s292
        $region40: #{tpu_custom_call.1} parent=35 // pred_fallthru
          _
      $region36: #{tpu_custom_call.1} parent=5 // pred_fallthru
        _
      %p306 = scmp.le.s32.totalorder 1, %s25
      %p307 = scmp.lt.s32.totalorder %s25, 3
      %p308 = pnand %p306, %p307
      %p309 = pneg %p308
      // Predicated region
      $region41: #{tpu_custom_call.1} parent=5 // pred_check
        _
      $region42: #{tpu_custom_call.1} parent=5 // pred_check_branch
        %311 = sbr.rel (%p308) target = $region44
      $region43: #{tpu_custom_call.1} parent=5 // pred_region
        %s312 = ssub.s32 %s25, 1
        %s313 = sand.u32 %s38, 1
        %s314 = scalar_lea.sflag [#allocation3], %s313
        %s315 = sand.u32 %s38, 1
        %s316 = smul.addr %s315, 8
        %s317 = scalar_lea.vmem [#allocation2], %s316
        // Predicated region
        $region45: #{tpu_custom_call.1} parent=43 // pred_check
          %p318 = pneg %p51
        $region46: #{tpu_custom_call.1} parent=43 // pred_check_branch
          %320 = sbr.rel (%p318) target = $region48
        $region47: #{tpu_custom_call.1} parent=43 // pred_region
          %321 = dma.done %s314, 128
        $region48: #{tpu_custom_call.1} parent=43 // pred_fallthru
          _
        // Predicated region
        $region49: #{tpu_custom_call.1} parent=43 // pred_check
          %p322 = pneg %p72
        $region50: #{tpu_custom_call.1} parent=43 // pred_check_branch
          %324 = sbr.rel (%p322) target = $region52
        $region51: #{tpu_custom_call.1} parent=43 // pred_region
          %325 = dma.done [#allocation6], 512
        $region52: #{tpu_custom_call.1} parent=43 // pred_fallthru
          _
        // Predicated region
        $region53: #{tpu_custom_call.1} parent=43 // pred_check
          %p326 = pneg %p114
        $region54: #{tpu_custom_call.1} parent=43 // pred_check_branch
          %328 = sbr.rel (%p326) target = $region56
        $region55: #{tpu_custom_call.1} parent=43 // pred_region
          %329 = dma.done [#allocation6], 512
        $region56: #{tpu_custom_call.1} parent=43 // pred_fallthru
          _
        %s330 = sand.u32 %s38, 1
        %s331 = scalar_lea.sflag [#allocation3], %s330
        %s332 = sand.u32 %s38, 1
        %s333 = smul.addr %s332, 8
        %s334 = scalar_lea.vmem [#allocation2], %s333
        %p335 = pneg %p51
        %p336 = pneg %p48
        %p337 = pneg %p72
        %p338 = pneg %p69
        %p339 = pneg %p93
        %p340 = pneg %p90
        %p341 = pneg %p114
        %p342 = pneg %p111
        %p343 = pneg %p135
        %p344 = pneg %p132
        %p345 = pneg %p156
        %p346 = pneg %p153
        %p347 = pneg %p182
        %p348 = pneg %p179
        %s349 = sand.u32 %s169, 1
        %s350 = scalar_lea.sflag [#allocation4], %s349
        %s351 = sand.u32 %s169, 1
        %s352 = smul.addr %s351, 8
        %s353 = scalar_lea.vmem [#allocation8], %s352
        %p354 = pneg %p208
        %p355 = pneg %p205
        %s356 = sand.u32 %s30, 1
        %s357 = scalar_lea.sflag [#allocation10], %s356
        %s358 = sand.u32 %s195, 1
        %s359 = smul.addr %s358, 8
        %s360 = scalar_lea.vmem [#allocation9], %s359
        %p361 = pneg %p234
        %p362 = pneg %p231
        %s363 = sand.u32 %s30, 1
        %s364 = scalar_lea.sflag [#allocation10], %s363
        %s365 = sand.u32 %s221, 1
        %s366 = smul.addr %s365, 8
        %s367 = scalar_lea.vmem [#allocation11], %s366
        %v368 = vld [vmem:[%s317] sm:$0xff]
        %v369 = vld [vmem:[#allocation5] sm:$0xff]
        %v370 = vld [vmem:[#allocation5 + $0x8] sm:$0xff]
        %v371 = vld [vmem:[#allocation5 + $0x10] sm:$0xff]
        %v372 = vld [vmem:[#allocation5 + $0x18] sm:$0xff]
        %v373 = vld [vmem:[%s2] sm:$0x1]
        %v375 = vlaneseq
        %v376 = vshrl.u32 %v375, 7
        %v377 = vsub.s32 0, %v376
        %v378 = vrot.slane %v373, %v377
        %vm380 = vcmask 261120
        %v382 = vsel %vm380, %v368, 0
        %384 = vmatprep.subr.mxu0 0.0
        %385 = vmatpush1.msra.mxu0 %v369
        %386 = vmatprep.subr.mxu0 0.0
        %387 = vmatpush1.msra.mxu0 %v370
        %388 = vmatprep.subr.mxu0 0.0
        %389 = vmatpush1.msra.mxu0 %v371
        %390 = vmatprep.subr.mxu0 0.0
        %391 = vmatpush1.msra.mxu0 %v372
        %392 = vmatprep.subr.mxu0 0.0
        %393 = vmatpush1.msra.mxu0 0.0
        %394 = vmatprep.subr.mxu0 0.0
        %395 = vmatpush1.msra.mxu0 0.0
        %396 = vmatprep.subr.mxu0 0.0
        %397 = vmatpush1.msra.mxu0 0.0
        %398 = vmatprep.subr.mxu0 0.0
        %399 = vmatpush1.msra.mxu0 0.0
        %400 = vmatprep.subr.mxu0 0.0
        %401 = vmatpush1.msra.mxu0 0.0
        %402 = vmatprep.subr.mxu0 0.0
        %403 = vmatpush1.msra.mxu0 0.0
        %404 = vmatprep.subr.mxu0 0.0
        %405 = vmatpush1.msra.mxu0 0.0
        %406 = vmatprep.subr.mxu0 0.0
        %407 = vmatpush1.msra.mxu0 0.0
        %408 = vmatprep.subr.mxu0 0.0
        %409 = vmatpush1.msra.mxu0 0.0
        %410 = vmatprep.subr.mxu0 0.0
        %411 = vmatpush1.msra.mxu0 0.0
        %412 = vmatprep.subr.mxu0 0.0
        %413 = vmatpush1.msra.mxu0 0.0
        %414 = vmatprep.subr.mxu0 0.0
        %415 = vmatpush1.msra.mxu0 0.0
        %416 = vmatprep.subr.mxu0 0.0
        %417 = vmatpush1.msra.mxu0 0.0
        %418 = vmatprep.subr.mxu0 0.0
        %419 = vmatpush1.msra.mxu0 0.0
        %420 = vmatprep.subr.mxu0 0.0
        %421 = vmatpush1.msra.mxu0 0.0
        %422 = vmatprep.subr.mxu0 0.0
        %423 = vmatpush1.msra.mxu0 0.0
        %424 = vmatprep.subr.mxu0 0.0
        %425 = vmatpush1.msra.mxu0 0.0
        %426 = vmatprep.subr.mxu0 0.0
        %427 = vmatpush1.msra.mxu0 0.0
        %428 = vmatprep.subr.mxu0 0.0
        %429 = vmatpush1.msra.mxu0 0.0
        %430 = vmatprep.subr.mxu0 0.0
        %431 = vmatpush1.msra.mxu0 0.0
        %432 = vmatprep.subr.mxu0 0.0
        %433 = vmatpush1.msra.mxu0 0.0
        %434 = vmatprep.subr.mxu0 0.0
        %435 = vmatpush1.msra.mxu0 0.0
        %436 = vmatprep.subr.mxu0 0.0
        %437 = vmatpush1.msra.mxu0 0.0
        %438 = vmatprep.subr.mxu0 0.0
        %439 = vmatpush1.msra.mxu0 0.0
        %440 = vmatprep.subr.mxu0 0.0
        %441 = vmatpush1.msra.mxu0 0.0
        %442 = vmatprep.subr.mxu0 0.0
        %443 = vmatpush1.msra.mxu0 0.0
        %444 = vmatprep.subr.mxu0 0.0
        %445 = vmatpush1.msra.mxu0 0.0
        %446 = vmatprep.subr.mxu0 0.0
        %447 = vmatpush1.msra.mxu0 0.0
        %448 = vmatprep.mubr.f32.mxu0 0.0
        %449 = vmatmul.mubr.f32.gmra.mrb[0].mxu0 %v382
        %v450 = vpop.f32.mrb[0].mxu0
        %v451 = vadd.f32 %v378, %v450
        %v452 = vpop.f32.mrb[0].mxu0
        %453 = vdwg.mxu0
        %v454 = vmul.f32 %v451, 0.35355338
        %456 = vrot.lane.b32.xlu0 %v451, 96
        %v457 = vpop.permute.xlu0 %456
        %459 = vst.msk [vmem:[%s360] sm:$0xff] %vm380, %v457
        %460 = vrot.lane.b32.xlu0 %v451, 64
        %v461 = vpop.permute.xlu0 %460
        %463 = vst.msk [vmem:[%s367] sm:$0xff] %vm380, %v461
        %v464 = vld [vmem:[%s5] sm:$0xff]
        %vm465 = vcmask 64512
        %v467 = vsel %vm465, %v454, 0
        %v469 = vsel %vm465, %v457, 0
        %471 = vmatprep.subr.mxu0 0.0
        %472 = vmatpush1.xpose.msra.mxu0 %v469
        %473 = vmatprep.subr.mxu0 0.0
        %474 = vmatpush1.xpose.msra.mxu0 0.0
        %475 = vmatprep.subr.mxu0 0.0
        %476 = vmatpush1.xpose.msra.mxu0 0.0
        %477 = vmatprep.subr.mxu0 0.0
        %478 = vmatpush1.xpose.msra.mxu0 0.0
        %479 = vmatprep.subr.mxu0 0.0
        %480 = vmatpush1.xpose.msra.mxu0 0.0
        %481 = vmatprep.subr.mxu0 0.0
        %482 = vmatpush1.xpose.msra.mxu0 0.0
        %483 = vmatprep.subr.mxu0 0.0
        %484 = vmatpush1.xpose.msra.mxu0 0.0
        %485 = vmatprep.subr.mxu0 0.0
        %486 = vmatpush1.xpose.msra.mxu0 0.0
        %487 = vmatprep.subr.mxu0 0.0
        %488 = vmatpush1.xpose.msra.mxu0 0.0
        %489 = vmatprep.subr.mxu0 0.0
        %490 = vmatpush1.xpose.msra.mxu0 0.0
        %491 = vmatprep.subr.mxu0 0.0
        %492 = vmatpush1.xpose.msra.mxu0 0.0
        %493 = vmatprep.subr.mxu0 0.0
        %494 = vmatpush1.xpose.msra.mxu0 0.0
        %495 = vmatprep.subr.mxu0 0.0
        %496 = vmatpush1.xpose.msra.mxu0 0.0
        %497 = vmatprep.subr.mxu0 0.0
        %498 = vmatpush1.xpose.msra.mxu0 0.0
        %499 = vmatprep.subr.mxu0 0.0
        %500 = vmatpush1.xpose.msra.mxu0 0.0
        %501 = vmatprep.subr.mxu0 0.0
        %502 = vmatpush1.xpose.msra.mxu0 0.0
        %503 = vmatprep.subr.mxu0 0.0
        %504 = vmatpush1.xpose.msra.mxu0 0.0
        %505 = vmatprep.subr.mxu0 0.0
        %506 = vmatpush1.xpose.msra.mxu0 0.0
        %507 = vmatprep.subr.mxu0 0.0
        %508 = vmatpush1.xpose.msra.mxu0 0.0
        %509 = vmatprep.subr.mxu0 0.0
        %510 = vmatpush1.xpose.msra.mxu0 0.0
        %511 = vmatprep.subr.mxu0 0.0
        %512 = vmatpush1.xpose.msra.mxu0 0.0
        %513 = vmatprep.subr.mxu0 0.0
        %514 = vmatpush1.xpose.msra.mxu0 0.0
        %515 = vmatprep.subr.mxu0 0.0
        %516 = vmatpush1.xpose.msra.mxu0 0.0
        %517 = vmatprep.subr.mxu0 0.0
        %518 = vmatpush1.xpose.msra.mxu0 0.0
        %519 = vmatprep.subr.mxu0 0.0
        %520 = vmatpush1.xpose.msra.mxu0 0.0
        %521 = vmatprep.subr.mxu0 0.0
        %522 = vmatpush1.xpose.msra.mxu0 0.0
        %523 = vmatprep.subr.mxu0 0.0
        %524 = vmatpush1.xpose.msra.mxu0 0.0
        %525 = vmatprep.subr.mxu0 0.0
        %526 = vmatpush1.xpose.msra.mxu0 0.0
        %527 = vmatprep.subr.mxu0 0.0
        %528 = vmatpush1.xpose.msra.mxu0 0.0
        %529 = vmatprep.subr.mxu0 0.0
        %530 = vmatpush1.xpose.msra.mxu0 0.0
        %531 = vmatprep.subr.mxu0 0.0
        %532 = vmatpush1.xpose.msra.mxu0 0.0
        %533 = vmatprep.subr.mxu0 0.0
        %534 = vmatpush1.xpose.msra.mxu0 0.0
        %535 = vmatprep.mubr.f32.mxu0 0.0
        %536 = vmatmul.mubr.f32.gmra.mrb[0].mxu0 %v467
        %v537 = vpop.f32.mrb[0].mxu0
        %v538 = vadd.f32 %v464, %v537
        %v539 = vpop.f32.mrb[0].mxu0
        %540 = vdwg.mxu0
        %v541 = vsel %vm465, %v538, -inf
        %542 = vmax.xlane.f32.xlu0 %v541
        %v543 = vpop.xlane.xlu0 %542
        %v544 = vsub.f32 %v538, %v543
        %v545 = vmul.f32 %v544, 1.442695
        %v546 = vpow.pop %v545
        %v547 = vsel %vm465, %v546, 0.0
        %548 = vadd.xlane.f32.xlu0 %v547
        %v549 = vpop.xlane.xlu0 %548
        %v550 = vrcp.pop %v549
        %v551 = vmul.f32 %v546, %v550
        %v553 = vsel %vm465, %v551, 0
        %555 = vmatprep.subr.mxu0 0.0
        %556 = vmatpush1.msra.mxu0 %v461
        %557 = vmatprep.subr.mxu0 0.0
        %558 = vmatpush1.msra.mxu0 0.0
        %559 = vmatprep.subr.mxu0 0.0
        %560 = vmatpush1.msra.mxu0 0.0
        %561 = vmatprep.subr.mxu0 0.0
        %562 = vmatpush1.msra.mxu0 0.0
        %563 = vmatprep.subr.mxu0 0.0
        %564 = vmatpush1.msra.mxu0 0.0
        %565 = vmatprep.subr.mxu0 0.0
        %566 = vmatpush1.msra.mxu0 0.0
        %567 = vmatprep.subr.mxu0 0.0
        %568 = vmatpush1.msra.mxu0 0.0
        %569 = vmatprep.subr.mxu0 0.0
        %570 = vmatpush1.msra.mxu0 0.0
        %571 = vmatprep.subr.mxu0 0.0
        %572 = vmatpush1.msra.mxu0 0.0
        %573 = vmatprep.subr.mxu0 0.0
        %574 = vmatpush1.msra.mxu0 0.0
        %575 = vmatprep.subr.mxu0 0.0
        %576 = vmatpush1.msra.mxu0 0.0
        %577 = vmatprep.subr.mxu0 0.0
        %578 = vmatpush1.msra.mxu0 0.0
        %579 = vmatprep.subr.mxu0 0.0
        %580 = vmatpush1.msra.mxu0 0.0
        %581 = vmatprep.subr.mxu0 0.0
        %582 = vmatpush1.msra.mxu0 0.0
        %583 = vmatprep.subr.mxu0 0.0
        %584 = vmatpush1.msra.mxu0 0.0
        %585 = vmatprep.subr.mxu0 0.0
        %586 = vmatpush1.msra.mxu0 0.0
        %587 = vmatprep.subr.mxu0 0.0
        %588 = vmatpush1.msra.mxu0 0.0
        %589 = vmatprep.subr.mxu0 0.0
        %590 = vmatpush1.msra.mxu0 0.0
        %591 = vmatprep.subr.mxu0 0.0
        %592 = vmatpush1.msra.mxu0 0.0
        %593 = vmatprep.subr.mxu0 0.0
        %594 = vmatpush1.msra.mxu0 0.0
        %595 = vmatprep.subr.mxu0 0.0
        %596 = vmatpush1.msra.mxu0 0.0
        %597 = vmatprep.subr.mxu0 0.0
        %598 = vmatpush1.msra.mxu0 0.0
        %599 = vmatprep.subr.mxu0 0.0
        %600 = vmatpush1.msra.mxu0 0.0
        %601 = vmatprep.subr.mxu0 0.0
        %602 = vmatpush1.msra.mxu0 0.0
        %603 = vmatprep.subr.mxu0 0.0
        %604 = vmatpush1.msra.mxu0 0.0
        %605 = vmatprep.subr.mxu0 0.0
        %606 = vmatpush1.msra.mxu0 0.0
        %607 = vmatprep.subr.mxu0 0.0
        %608 = vmatpush1.msra.mxu0 0.0
        %609 = vmatprep.subr.mxu0 0.0
        %610 = vmatpush1.msra.mxu0 0.0
        %611 = vmatprep.subr.mxu0 0.0
        %612 = vmatpush1.msra.mxu0 0.0
        %613 = vmatprep.subr.mxu0 0.0
        %614 = vmatpush1.msra.mxu0 0.0
        %615 = vmatprep.subr.mxu0 0.0
        %616 = vmatpush1.msra.mxu0 0.0
        %617 = vmatprep.subr.mxu0 0.0
        %618 = vmatpush1.msra.mxu0 0.0
        %619 = vmatprep.mubr.f32.mxu0 0.0
        %620 = vmatmul.mubr.f32.gmra.mrb[0].mxu0 %v553
        %v621 = vpop.f32.mrb[0].mxu0
        %v622 = vadd.f32 0.0, %v621
        %v623 = vpop.f32.mrb[0].mxu0
        %624 = vdwg.mxu0
        %v625 = vld [vmem:[#allocation7] sm:$0xff]
        %626 = vrot.lane.b32.xlu0 %v454, 120
        %v627 = vpop.permute.xlu0 %626
        %628 = vrot.lane.b32.xlu0 %v451, 88
        %v629 = vpop.permute.xlu0 %628
        %v630 = vsel %vm465, %v627, 0
        %v632 = vsel %vm465, %v629, 0
        %634 = vmatprep.subr.mxu0 0.0
        %635 = vmatpush1.xpose.msra.mxu0 %v632
        %636 = vmatprep.subr.mxu0 0.0
        %637 = vmatpush1.xpose.msra.mxu0 0.0
        %638 = vmatprep.subr.mxu0 0.0
        %639 = vmatpush1.xpose.msra.mxu0 0.0
        %640 = vmatprep.subr.mxu0 0.0
        %641 = vmatpush1.xpose.msra.mxu0 0.0
        %642 = vmatprep.subr.mxu0 0.0
        %643 = vmatpush1.xpose.msra.mxu0 0.0
        %644 = vmatprep.subr.mxu0 0.0
        %645 = vmatpush1.xpose.msra.mxu0 0.0
        %646 = vmatprep.subr.mxu0 0.0
        %647 = vmatpush1.xpose.msra.mxu0 0.0
        %648 = vmatprep.subr.mxu0 0.0
        %649 = vmatpush1.xpose.msra.mxu0 0.0
        %650 = vmatprep.subr.mxu0 0.0
        %651 = vmatpush1.xpose.msra.mxu0 0.0
        %652 = vmatprep.subr.mxu0 0.0
        %653 = vmatpush1.xpose.msra.mxu0 0.0
        %654 = vmatprep.subr.mxu0 0.0
        %655 = vmatpush1.xpose.msra.mxu0 0.0
        %656 = vmatprep.subr.mxu0 0.0
        %657 = vmatpush1.xpose.msra.mxu0 0.0
        %658 = vmatprep.subr.mxu0 0.0
        %659 = vmatpush1.xpose.msra.mxu0 0.0
        %660 = vmatprep.subr.mxu0 0.0
        %661 = vmatpush1.xpose.msra.mxu0 0.0
        %662 = vmatprep.subr.mxu0 0.0
        %663 = vmatpush1.xpose.msra.mxu0 0.0
        %664 = vmatprep.subr.mxu0 0.0
        %665 = vmatpush1.xpose.msra.mxu0 0.0
        %666 = vmatprep.subr.mxu0 0.0
        %667 = vmatpush1.xpose.msra.mxu0 0.0
        %668 = vmatprep.subr.mxu0 0.0
        %669 = vmatpush1.xpose.msra.mxu0 0.0
        %670 = vmatprep.subr.mxu0 0.0
        %671 = vmatpush1.xpose.msra.mxu0 0.0
        %672 = vmatprep.subr.mxu0 0.0
        %673 = vmatpush1.xpose.msra.mxu0 0.0
        %674 = vmatprep.subr.mxu0 0.0
        %675 = vmatpush1.xpose.msra.mxu0 0.0
        %676 = vmatprep.subr.mxu0 0.0
        %677 = vmatpush1.xpose.msra.mxu0 0.0
        %678 = vmatprep.subr.mxu0 0.0
        %679 = vmatpush1.xpose.msra.mxu0 0.0
        %680 = vmatprep.subr.mxu0 0.0
        %681 = vmatpush1.xpose.msra.mxu0 0.0
        %682 = vmatprep.subr.mxu0 0.0
        %683 = vmatpush1.xpose.msra.mxu0 0.0
        %684 = vmatprep.subr.mxu0 0.0
        %685 = vmatpush1.xpose.msra.mxu0 0.0
        %686 = vmatprep.subr.mxu0 0.0
        %687 = vmatpush1.xpose.msra.mxu0 0.0
        %688 = vmatprep.subr.mxu0 0.0
        %689 = vmatpush1.xpose.msra.mxu0 0.0
        %690 = vmatprep.subr.mxu0 0.0
        %691 = vmatpush1.xpose.msra.mxu0 0.0
        %692 = vmatprep.subr.mxu0 0.0
        %693 = vmatpush1.xpose.msra.mxu0 0.0
        %694 = vmatprep.subr.mxu0 0.0
        %695 = vmatpush1.xpose.msra.mxu0 0.0
        %696 = vmatprep.subr.mxu0 0.0
        %697 = vmatpush1.xpose.msra.mxu0 0.0
        %698 = vmatprep.mubr.f32.mxu0 0.0
        %699 = vmatmul.mubr.f32.gmra.mrb[0].mxu0 %v630
        %v700 = vpop.f32.mrb[0].mxu0
        %v701 = vadd.f32 %v464, %v700
        %v702 = vpop.f32.mrb[0].mxu0
        %703 = vdwg.mxu0
        %v704 = vsel %vm465, %v701, -inf
        %705 = vmax.xlane.f32.xlu0 %v704
        %v706 = vpop.xlane.xlu0 %705
        %v707 = vsub.f32 %v701, %v706
        %v708 = vmul.f32 %v707, 1.442695
        %v709 = vpow.pop %v708
        %v710 = vsel %vm465, %v709, 0.0
        %711 = vadd.xlane.f32.xlu0 %v710
        %v712 = vpop.xlane.xlu0 %711
        %v713 = vrcp.pop %v712
        %v714 = vmul.f32 %v709, %v713
        %715 = vrot.lane.b32.xlu0 %v451, 56
        %v716 = vpop.permute.xlu0 %715
        %v719 = vsel %vm465, %v714, 0
        %721 = vmatprep.subr.mxu0 0.0
        %722 = vmatpush1.msra.mxu0 %v716
        %723 = vmatprep.subr.mxu0 0.0
        %724 = vmatpush1.msra.mxu0 0.0
        %725 = vmatprep.subr.mxu0 0.0
        %726 = vmatpush1.msra.mxu0 0.0
        %727 = vmatprep.subr.mxu0 0.0
        %728 = vmatpush1.msra.mxu0 0.0
        %729 = vmatprep.subr.mxu0 0.0
        %730 = vmatpush1.msra.mxu0 0.0
        %731 = vmatprep.subr.mxu0 0.0
        %732 = vmatpush1.msra.mxu0 0.0
        %733 = vmatprep.subr.mxu0 0.0
        %734 = vmatpush1.msra.mxu0 0.0
        %735 = vmatprep.subr.mxu0 0.0
        %736 = vmatpush1.msra.mxu0 0.0
        %737 = vmatprep.subr.mxu0 0.0
        %738 = vmatpush1.msra.mxu0 0.0
        %739 = vmatprep.subr.mxu0 0.0
        %740 = vmatpush1.msra.mxu0 0.0
        %741 = vmatprep.subr.mxu0 0.0
        %742 = vmatpush1.msra.mxu0 0.0
        %743 = vmatprep.subr.mxu0 0.0
        %744 = vmatpush1.msra.mxu0 0.0
        %745 = vmatprep.subr.mxu0 0.0
        %746 = vmatpush1.msra.mxu0 0.0
        %747 = vmatprep.subr.mxu0 0.0
        %748 = vmatpush1.msra.mxu0 0.0
        %749 = vmatprep.subr.mxu0 0.0
        %750 = vmatpush1.msra.mxu0 0.0
        %751 = vmatprep.subr.mxu0 0.0
        %752 = vmatpush1.msra.mxu0 0.0
        %753 = vmatprep.subr.mxu0 0.0
        %754 = vmatpush1.msra.mxu0 0.0
        %755 = vmatprep.subr.mxu0 0.0
        %756 = vmatpush1.msra.mxu0 0.0
        %757 = vmatprep.subr.mxu0 0.0
        %758 = vmatpush1.msra.mxu0 0.0
        %759 = vmatprep.subr.mxu0 0.0
        %760 = vmatpush1.msra.mxu0 0.0
        %761 = vmatprep.subr.mxu0 0.0
        %762 = vmatpush1.msra.mxu0 0.0
        %763 = vmatprep.subr.mxu0 0.0
        %764 = vmatpush1.msra.mxu0 0.0
        %765 = vmatprep.subr.mxu0 0.0
        %766 = vmatpush1.msra.mxu0 0.0
        %767 = vmatprep.subr.mxu0 0.0
        %768 = vmatpush1.msra.mxu0 0.0
        %769 = vmatprep.subr.mxu0 0.0
        %770 = vmatpush1.msra.mxu0 0.0
        %771 = vmatprep.subr.mxu0 0.0
        %772 = vmatpush1.msra.mxu0 0.0
        %773 = vmatprep.subr.mxu0 0.0
        %774 = vmatpush1.msra.mxu0 0.0
        %775 = vmatprep.subr.mxu0 0.0
        %776 = vmatpush1.msra.mxu0 0.0
        %777 = vmatprep.subr.mxu0 0.0
        %778 = vmatpush1.msra.mxu0 0.0
        %779 = vmatprep.subr.mxu0 0.0
        %780 = vmatpush1.msra.mxu0 0.0
        %781 = vmatprep.subr.mxu0 0.0
        %782 = vmatpush1.msra.mxu0 0.0
        %783 = vmatprep.subr.mxu0 0.0
        %784 = vmatpush1.msra.mxu0 0.0
        %785 = vmatprep.mubr.f32.mxu0 0.0
        %786 = vmatmul.mubr.f32.gmra.mrb[0].mxu0 %v719
        %v787 = vpop.f32.mrb[0].mxu0
        %v788 = vadd.f32 0.0, %v787
        %v789 = vpop.f32.mrb[0].mxu0
        %790 = vdwg.mxu0
        %v791 = vld [vmem:[#allocation7 + $0x8] sm:$0xff]
        %v793 = vsel %vm465, %v788, 0
        %795 = vmatprep.subr.mxu0 0.0
        %796 = vmatpush1.msra.mxu0 %v791
        %797 = vmatprep.subr.mxu0 0.0
        %798 = vmatpush1.msra.mxu0 0.0
        %799 = vmatprep.subr.mxu0 0.0
        %800 = vmatpush1.msra.mxu0 0.0
        %801 = vmatprep.subr.mxu0 0.0
        %802 = vmatpush1.msra.mxu0 0.0
        %803 = vmatprep.subr.mxu0 0.0
        %804 = vmatpush1.msra.mxu0 0.0
        %805 = vmatprep.subr.mxu0 0.0
        %806 = vmatpush1.msra.mxu0 0.0
        %807 = vmatprep.subr.mxu0 0.0
        %808 = vmatpush1.msra.mxu0 0.0
        %809 = vmatprep.subr.mxu0 0.0
        %810 = vmatpush1.msra.mxu0 0.0
        %811 = vmatprep.subr.mxu0 0.0
        %812 = vmatpush1.msra.mxu0 0.0
        %813 = vmatprep.subr.mxu0 0.0
        %814 = vmatpush1.msra.mxu0 0.0
        %815 = vmatprep.subr.mxu0 0.0
        %816 = vmatpush1.msra.mxu0 0.0
        %817 = vmatprep.subr.mxu0 0.0
        %818 = vmatpush1.msra.mxu0 0.0
        %819 = vmatprep.subr.mxu0 0.0
        %820 = vmatpush1.msra.mxu0 0.0
        %821 = vmatprep.subr.mxu0 0.0
        %822 = vmatpush1.msra.mxu0 0.0
        %823 = vmatprep.subr.mxu0 0.0
        %824 = vmatpush1.msra.mxu0 0.0
        %825 = vmatprep.subr.mxu0 0.0
        %826 = vmatpush1.msra.mxu0 0.0
        %827 = vmatprep.subr.mxu0 0.0
        %828 = vmatpush1.msra.mxu0 0.0
        %829 = vmatprep.subr.mxu0 0.0
        %830 = vmatpush1.msra.mxu0 0.0
        %831 = vmatprep.subr.mxu0 0.0
        %832 = vmatpush1.msra.mxu0 0.0
        %833 = vmatprep.subr.mxu0 0.0
        %834 = vmatpush1.msra.mxu0 0.0
        %835 = vmatprep.subr.mxu0 0.0
        %836 = vmatpush1.msra.mxu0 0.0
        %837 = vmatprep.subr.mxu0 0.0
        %838 = vmatpush1.msra.mxu0 0.0
        %839 = vmatprep.subr.mxu0 0.0
        %840 = vmatpush1.msra.mxu0 0.0
        %841 = vmatprep.subr.mxu0 0.0
        %842 = vmatpush1.msra.mxu0 0.0
        %843 = vmatprep.subr.mxu0 0.0
        %844 = vmatpush1.msra.mxu0 0.0
        %845 = vmatprep.subr.mxu0 0.0
        %846 = vmatpush1.msra.mxu0 0.0
        %847 = vmatprep.subr.mxu0 0.0
        %848 = vmatpush1.msra.mxu0 0.0
        %849 = vmatprep.subr.mxu0 0.0
        %850 = vmatpush1.msra.mxu0 0.0
        %851 = vmatprep.subr.mxu0 0.0
        %852 = vmatpush1.msra.mxu0 0.0
        %853 = vmatprep.subr.mxu0 0.0
        %854 = vmatpush1.msra.mxu0 0.0
        %855 = vmatprep.subr.mxu0 0.0
        %856 = vmatpush1.msra.mxu0 0.0
        %857 = vmatprep.subr.mxu0 0.0
        %858 = vmatpush1.msra.mxu0 0.0
        %859 = vmatprep.mubr.f32.mxu0 0.0
        %860 = vmatmul.mubr.f32.gmra.mrb[0].mxu0 %v793
        %v861 = vpop.f32.mrb[0].mxu0
        %v862 = vadd.f32 0.0, %v861
        %v863 = vpop.f32.mrb[0].mxu0
        %864 = vdwg.mxu0
        %v866 = vsel %vm465, %v622, 0
        %868 = vmatprep.subr.mxu0 0.0
        %869 = vmatpush1.msra.mxu0 %v625
        %870 = vmatprep.subr.mxu0 0.0
        %871 = vmatpush1.msra.mxu0 0.0
        %872 = vmatprep.subr.mxu0 0.0
        %873 = vmatpush1.msra.mxu0 0.0
        %874 = vmatprep.subr.mxu0 0.0
        %875 = vmatpush1.msra.mxu0 0.0
        %876 = vmatprep.subr.mxu0 0.0
        %877 = vmatpush1.msra.mxu0 0.0
        %878 = vmatprep.subr.mxu0 0.0
        %879 = vmatpush1.msra.mxu0 0.0
        %880 = vmatprep.subr.mxu0 0.0
        %881 = vmatpush1.msra.mxu0 0.0
        %882 = vmatprep.subr.mxu0 0.0
        %883 = vmatpush1.msra.mxu0 0.0
        %884 = vmatprep.subr.mxu0 0.0
        %885 = vmatpush1.msra.mxu0 0.0
        %886 = vmatprep.subr.mxu0 0.0
        %887 = vmatpush1.msra.mxu0 0.0
        %888 = vmatprep.subr.mxu0 0.0
        %889 = vmatpush1.msra.mxu0 0.0
        %890 = vmatprep.subr.mxu0 0.0
        %891 = vmatpush1.msra.mxu0 0.0
        %892 = vmatprep.subr.mxu0 0.0
        %893 = vmatpush1.msra.mxu0 0.0
        %894 = vmatprep.subr.mxu0 0.0
        %895 = vmatpush1.msra.mxu0 0.0
        %896 = vmatprep.subr.mxu0 0.0
        %897 = vmatpush1.msra.mxu0 0.0
        %898 = vmatprep.subr.mxu0 0.0
        %899 = vmatpush1.msra.mxu0 0.0
        %900 = vmatprep.subr.mxu0 0.0
        %901 = vmatpush1.msra.mxu0 0.0
        %902 = vmatprep.subr.mxu0 0.0
        %903 = vmatpush1.msra.mxu0 0.0
        %904 = vmatprep.subr.mxu0 0.0
        %905 = vmatpush1.msra.mxu0 0.0
        %906 = vmatprep.subr.mxu0 0.0
        %907 = vmatpush1.msra.mxu0 0.0
        %908 = vmatprep.subr.mxu0 0.0
        %909 = vmatpush1.msra.mxu0 0.0
        %910 = vmatprep.subr.mxu0 0.0
        %911 = vmatpush1.msra.mxu0 0.0
        %912 = vmatprep.subr.mxu0 0.0
        %913 = vmatpush1.msra.mxu0 0.0
        %914 = vmatprep.subr.mxu0 0.0
        %915 = vmatpush1.msra.mxu0 0.0
        %916 = vmatprep.subr.mxu0 0.0
        %917 = vmatpush1.msra.mxu0 0.0
        %918 = vmatprep.subr.mxu0 0.0
        %919 = vmatpush1.msra.mxu0 0.0
        %920 = vmatprep.subr.mxu0 0.0
        %921 = vmatpush1.msra.mxu0 0.0
        %922 = vmatprep.subr.mxu0 0.0
        %923 = vmatpush1.msra.mxu0 0.0
        %924 = vmatprep.subr.mxu0 0.0
        %925 = vmatpush1.msra.mxu0 0.0
        %926 = vmatprep.subr.mxu0 0.0
        %927 = vmatpush1.msra.mxu0 0.0
        %928 = vmatprep.subr.mxu0 0.0
        %929 = vmatpush1.msra.mxu0 0.0
        %930 = vmatprep.subr.mxu0 0.0
        %931 = vmatpush1.msra.mxu0 0.0
        %932 = vmatprep.mubr.f32.mxu0 0.0
        %933 = vmatmul.mubr.f32.gmra.mrb[0].mxu0 %v866
        %v934 = vpop.f32.mrb[0].mxu0
        %v935 = vadd.f32 %v862, %v934
        %v936 = vpop.f32.mrb[0].mxu0
        %937 = vdwg.mxu0
        %938 = vrot.lane.b32.xlu0 %v454, 112
        %v939 = vpop.permute.xlu0 %938
        %940 = vrot.lane.b32.xlu0 %v451, 80
        %v941 = vpop.permute.xlu0 %940
        %v942 = vsel %vm465, %v939, 0
        %v944 = vsel %vm465, %v941, 0
        %946 = vmatprep.subr.mxu0 0.0
        %947 = vmatpush1.xpose.msra.mxu0 %v944
        %948 = vmatprep.subr.mxu0 0.0
        %949 = vmatpush1.xpose.msra.mxu0 0.0
        %950 = vmatprep.subr.mxu0 0.0
        %951 = vmatpush1.xpose.msra.mxu0 0.0
        %952 = vmatprep.subr.mxu0 0.0
        %953 = vmatpush1.xpose.msra.mxu0 0.0
        %954 = vmatprep.subr.mxu0 0.0
        %955 = vmatpush1.xpose.msra.mxu0 0.0
        %956 = vmatprep.subr.mxu0 0.0
        %957 = vmatpush1.xpose.msra.mxu0 0.0
        %958 = vmatprep.subr.mxu0 0.0
        %959 = vmatpush1.xpose.msra.mxu0 0.0
        %960 = vmatprep.subr.mxu0 0.0
        %961 = vmatpush1.xpose.msra.mxu0 0.0
        %962 = vmatprep.subr.mxu0 0.0
        %963 = vmatpush1.xpose.msra.mxu0 0.0
        %964 = vmatprep.subr.mxu0 0.0
        %965 = vmatpush1.xpose.msra.mxu0 0.0
        %966 = vmatprep.subr.mxu0 0.0
        %967 = vmatpush1.xpose.msra.mxu0 0.0
        %968 = vmatprep.subr.mxu0 0.0
        %969 = vmatpush1.xpose.msra.mxu0 0.0
        %970 = vmatprep.subr.mxu0 0.0
        %971 = vmatpush1.xpose.msra.mxu0 0.0
        %972 = vmatprep.subr.mxu0 0.0
        %973 = vmatpush1.xpose.msra.mxu0 0.0
        %974 = vmatprep.subr.mxu0 0.0
        %975 = vmatpush1.xpose.msra.mxu0 0.0
        %976 = vmatprep.subr.mxu0 0.0
        %977 = vmatpush1.xpose.msra.mxu0 0.0
        %978 = vmatprep.subr.mxu0 0.0
        %979 = vmatpush1.xpose.msra.mxu0 0.0
        %980 = vmatprep.subr.mxu0 0.0
        %981 = vmatpush1.xpose.msra.mxu0 0.0
        %982 = vmatprep.subr.mxu0 0.0
        %983 = vmatpush1.xpose.msra.mxu0 0.0
        %984 = vmatprep.subr.mxu0 0.0
        %985 = vmatpush1.xpose.msra.mxu0 0.0
        %986 = vmatprep.subr.mxu0 0.0
        %987 = vmatpush1.xpose.msra.mxu0 0.0
        %988 = vmatprep.subr.mxu0 0.0
        %989 = vmatpush1.xpose.msra.mxu0 0.0
        %990 = vmatprep.subr.mxu0 0.0
        %991 = vmatpush1.xpose.msra.mxu0 0.0
        %992 = vmatprep.subr.mxu0 0.0
        %993 = vmatpush1.xpose.msra.mxu0 0.0
        %994 = vmatprep.subr.mxu0 0.0
        %995 = vmatpush1.xpose.msra.mxu0 0.0
        %996 = vmatprep.subr.mxu0 0.0
        %997 = vmatpush1.xpose.msra.mxu0 0.0
        %998 = vmatprep.subr.mxu0 0.0
        %999 = vmatpush1.xpose.msra.mxu0 0.0
        %1000 = vmatprep.subr.mxu0 0.0
        %1001 = vmatpush1.xpose.msra.mxu0 0.0
        %1002 = vmatprep.subr.mxu0 0.0
        %1003 = vmatpush1.xpose.msra.mxu0 0.0
        %1004 = vmatprep.subr.mxu0 0.0
        %1005 = vmatpush1.xpose.msra.mxu0 0.0
        %1006 = vmatprep.subr.mxu0 0.0
        %1007 = vmatpush1.xpose.msra.mxu0 0.0
        %1008 = vmatprep.subr.mxu0 0.0
        %1009 = vmatpush1.xpose.msra.mxu0 0.0
        %1010 = vmatprep.mubr.f32.mxu0 0.0
        %1011 = vmatmul.mubr.f32.gmra.mrb[0].mxu0 %v942
        %v1012 = vpop.f32.mrb[0].mxu0
        %v1013 = vadd.f32 %v464, %v1012
        %v1014 = vpop.f32.mrb[0].mxu0
        %1015 = vdwg.mxu0
        %v1016 = vsel %vm465, %v1013, -inf
        %1017 = vmax.xlane.f32.xlu0 %v1016
        %v1018 = vpop.xlane.xlu0 %1017
        %v1019 = vsub.f32 %v1013, %v1018
        %v1020 = vmul.f32 %v1019, 1.442695
        %v1021 = vpow.pop %v1020
        %v1022 = vsel %vm465, %v1021, 0.0
        %1023 = vadd.xlane.f32.xlu0 %v1022
        %v1024 = vpop.xlane.xlu0 %1023
        %v1025 = vrcp.pop %v1024
        %v1026 = vmul.f32 %v1021, %v1025
        %1027 = vrot.lane.b32.xlu0 %v451, 48
        %v1028 = vpop.permute.xlu0 %1027
        %v1031 = vsel %vm465, %v1026, 0
        %1033 = vmatprep.subr.mxu0 0.0
        %1034 = vmatpush1.msra.mxu0 %v1028
        %1035 = vmatprep.subr.mxu0 0.0
        %1036 = vmatpush1.msra.mxu0 0.0
        %1037 = vmatprep.subr.mxu0 0.0
        %1038 = vmatpush1.msra.mxu0 0.0
        %1039 = vmatprep.subr.mxu0 0.0
        %1040 = vmatpush1.msra.mxu0 0.0
        %1041 = vmatprep.subr.mxu0 0.0
        %1042 = vmatpush1.msra.mxu0 0.0
        %1043 = vmatprep.subr.mxu0 0.0
        %1044 = vmatpush1.msra.mxu0 0.0
        %1045 = vmatprep.subr.mxu0 0.0
        %1046 = vmatpush1.msra.mxu0 0.0
        %1047 = vmatprep.subr.mxu0 0.0
        %1048 = vmatpush1.msra.mxu0 0.0
        %1049 = vmatprep.subr.mxu0 0.0
        %1050 = vmatpush1.msra.mxu0 0.0
        %1051 = vmatprep.subr.mxu0 0.0
        %1052 = vmatpush1.msra.mxu0 0.0
        %1053 = vmatprep.subr.mxu0 0.0
        %1054 = vmatpush1.msra.mxu0 0.0
        %1055 = vmatprep.subr.mxu0 0.0
        %1056 = vmatpush1.msra.mxu0 0.0
        %1057 = vmatprep.subr.mxu0 0.0
        %1058 = vmatpush1.msra.mxu0 0.0
        %1059 = vmatprep.subr.mxu0 0.0
        %1060 = vmatpush1.msra.mxu0 0.0
        %1061 = vmatprep.subr.mxu0 0.0
        %1062 = vmatpush1.msra.mxu0 0.0
        %1063 = vmatprep.subr.mxu0 0.0
        %1064 = vmatpush1.msra.mxu0 0.0
        %1065 = vmatprep.subr.mxu0 0.0
        %1066 = vmatpush1.msra.mxu0 0.0
        %1067 = vmatprep.subr.mxu0 0.0
        %1068 = vmatpush1.msra.mxu0 0.0
        %1069 = vmatprep.subr.mxu0 0.0
        %1070 = vmatpush1.msra.mxu0 0.0
        %1071 = vmatprep.subr.mxu0 0.0
        %1072 = vmatpush1.msra.mxu0 0.0
        %1073 = vmatprep.subr.mxu0 0.0
        %1074 = vmatpush1.msra.mxu0 0.0
        %1075 = vmatprep.subr.mxu0 0.0
        %1076 = vmatpush1.msra.mxu0 0.0
        %1077 = vmatprep.subr.mxu0 0.0
        %1078 = vmatpush1.msra.mxu0 0.0
        %1079 = vmatprep.subr.mxu0 0.0
        %1080 = vmatpush1.msra.mxu0 0.0
        %1081 = vmatprep.subr.mxu0 0.0
        %1082 = vmatpush1.msra.mxu0 0.0
        %1083 = vmatprep.subr.mxu0 0.0
        %1084 = vmatpush1.msra.mxu0 0.0
        %1085 = vmatprep.subr.mxu0 0.0
        %1086 = vmatpush1.msra.mxu0 0.0
        %1087 = vmatprep.subr.mxu0 0.0
        %1088 = vmatpush1.msra.mxu0 0.0
        %1089 = vmatprep.subr.mxu0 0.0
        %1090 = vmatpush1.msra.mxu0 0.0
        %1091 = vmatprep.subr.mxu0 0.0
        %1092 = vmatpush1.msra.mxu0 0.0
        %1093 = vmatprep.subr.mxu0 0.0
        %1094 = vmatpush1.msra.mxu0 0.0
        %1095 = vmatprep.subr.mxu0 0.0
        %1096 = vmatpush1.msra.mxu0 0.0
        %1097 = vmatprep.mubr.f32.mxu0 0.0
        %1098 = vmatmul.mubr.f32.gmra.mrb[0].mxu0 %v1031
        %v1099 = vpop.f32.mrb[0].mxu0
        %v1100 = vadd.f32 0.0, %v1099
        %v1101 = vpop.f32.mrb[0].mxu0
        %1102 = vdwg.mxu0
        %v1103 = vld [vmem:[#allocation7 + $0x10] sm:$0xff]
        %v1105 = vsel %vm465, %v1100, 0
        %1107 = vmatprep.subr.mxu0 0.0
        %1108 = vmatpush1.msra.mxu0 %v1103
        %1109 = vmatprep.subr.mxu0 0.0
        %1110 = vmatpush1.msra.mxu0 0.0
        %1111 = vmatprep.subr.mxu0 0.0
        %1112 = vmatpush1.msra.mxu0 0.0
        %1113 = vmatprep.subr.mxu0 0.0
        %1114 = vmatpush1.msra.mxu0 0.0
        %1115 = vmatprep.subr.mxu0 0.0
        %1116 = vmatpush1.msra.mxu0 0.0
        %1117 = vmatprep.subr.mxu0 0.0
        %1118 = vmatpush1.msra.mxu0 0.0
        %1119 = vmatprep.subr.mxu0 0.0
        %1120 = vmatpush1.msra.mxu0 0.0
        %1121 = vmatprep.subr.mxu0 0.0
        %1122 = vmatpush1.msra.mxu0 0.0
        %1123 = vmatprep.subr.mxu0 0.0
        %1124 = vmatpush1.msra.mxu0 0.0
        %1125 = vmatprep.subr.mxu0 0.0
        %1126 = vmatpush1.msra.mxu0 0.0
        %1127 = vmatprep.subr.mxu0 0.0
        %1128 = vmatpush1.msra.mxu0 0.0
        %1129 = vmatprep.subr.mxu0 0.0
        %1130 = vmatpush1.msra.mxu0 0.0
        %1131 = vmatprep.subr.mxu0 0.0
        %1132 = vmatpush1.msra.mxu0 0.0
        %1133 = vmatprep.subr.mxu0 0.0
        %1134 = vmatpush1.msra.mxu0 0.0
        %1135 = vmatprep.subr.mxu0 0.0
        %1136 = vmatpush1.msra.mxu0 0.0
        %1137 = vmatprep.subr.mxu0 0.0
        %1138 = vmatpush1.msra.mxu0 0.0
        %1139 = vmatprep.subr.mxu0 0.0
        %1140 = vmatpush1.msra.mxu0 0.0
        %1141 = vmatprep.subr.mxu0 0.0
        %1142 = vmatpush1.msra.mxu0 0.0
        %1143 = vmatprep.subr.mxu0 0.0
        %1144 = vmatpush1.msra.mxu0 0.0
        %1145 = vmatprep.subr.mxu0 0.0
        %1146 = vmatpush1.msra.mxu0 0.0
        %1147 = vmatprep.subr.mxu0 0.0
        %1148 = vmatpush1.msra.mxu0 0.0
        %1149 = vmatprep.subr.mxu0 0.0
        %1150 = vmatpush1.msra.mxu0 0.0
        %1151 = vmatprep.subr.mxu0 0.0
        %1152 = vmatpush1.msra.mxu0 0.0
        %1153 = vmatprep.subr.mxu0 0.0
        %1154 = vmatpush1.msra.mxu0 0.0
        %1155 = vmatprep.subr.mxu0 0.0
        %1156 = vmatpush1.msra.mxu0 0.0
        %1157 = vmatprep.subr.mxu0 0.0
        %1158 = vmatpush1.msra.mxu0 0.0
        %1159 = vmatprep.subr.mxu0 0.0
        %1160 = vmatpush1.msra.mxu0 0.0
        %1161 = vmatprep.subr.mxu0 0.0
        %1162 = vmatpush1.msra.mxu0 0.0
        %1163 = vmatprep.subr.mxu0 0.0
        %1164 = vmatpush1.msra.mxu0 0.0
        %1165 = vmatprep.subr.mxu0 0.0
        %1166 = vmatpush1.msra.mxu0 0.0
        %1167 = vmatprep.subr.mxu0 0.0
        %1168 = vmatpush1.msra.mxu0 0.0
        %1169 = vmatprep.subr.mxu0 0.0
        %1170 = vmatpush1.msra.mxu0 0.0
        %1171 = vmatprep.mubr.f32.mxu0 0.0
        %1172 = vmatmul.mubr.f32.gmra.mrb[0].mxu0 %v1105
        %v1173 = vpop.f32.mrb[0].mxu0
        %v1174 = vadd.f32 0.0, %v1173
        %v1175 = vpop.f32.mrb[0].mxu0
        %1176 = vdwg.mxu0
        %v1177 = vadd.f32 %v935, %v1174
        %1178 = vrot.lane.b32.xlu0 %v454, 104
        %v1179 = vpop.permute.xlu0 %1178
        %1180 = vrot.lane.b32.xlu0 %v451, 72
        %v1181 = vpop.permute.xlu0 %1180
        %v1182 = vsel %vm465, %v1179, 0
        %v1184 = vsel %vm465, %v1181, 0
        %1186 = vmatprep.subr.mxu0 0.0
        %1187 = vmatpush1.xpose.msra.mxu0 %v1184
        %1188 = vmatprep.subr.mxu0 0.0
        %1189 = vmatpush1.xpose.msra.mxu0 0.0
        %1190 = vmatprep.subr.mxu0 0.0
        %1191 = vmatpush1.xpose.msra.mxu0 0.0
        %1192 = vmatprep.subr.mxu0 0.0
        %1193 = vmatpush1.xpose.msra.mxu0 0.0
        %1194 = vmatprep.subr.mxu0 0.0
        %1195 = vmatpush1.xpose.msra.mxu0 0.0
        %1196 = vmatprep.subr.mxu0 0.0
        %1197 = vmatpush1.xpose.msra.mxu0 0.0
        %1198 = vmatprep.subr.mxu0 0.0
        %1199 = vmatpush1.xpose.msra.mxu0 0.0
        %1200 = vmatprep.subr.mxu0 0.0
        %1201 = vmatpush1.xpose.msra.mxu0 0.0
        %1202 = vmatprep.subr.mxu0 0.0
        %1203 = vmatpush1.xpose.msra.mxu0 0.0
        %1204 = vmatprep.subr.mxu0 0.0
        %1205 = vmatpush1.xpose.msra.mxu0 0.0
        %1206 = vmatprep.subr.mxu0 0.0
        %1207 = vmatpush1.xpose.msra.mxu0 0.0
        %1208 = vmatprep.subr.mxu0 0.0
        %1209 = vmatpush1.xpose.msra.mxu0 0.0
        %1210 = vmatprep.subr.mxu0 0.0
        %1211 = vmatpush1.xpose.msra.mxu0 0.0
        %1212 = vmatprep.subr.mxu0 0.0
        %1213 = vmatpush1.xpose.msra.mxu0 0.0
        %1214 = vmatprep.subr.mxu0 0.0
        %1215 = vmatpush1.xpose.msra.mxu0 0.0
        %1216 = vmatprep.subr.mxu0 0.0
        %1217 = vmatpush1.xpose.msra.mxu0 0.0
        %1218 = vmatprep.subr.mxu0 0.0
        %1219 = vmatpush1.xpose.msra.mxu0 0.0
        %1220 = vmatprep.subr.mxu0 0.0
        %1221 = vmatpush1.xpose.msra.mxu0 0.0
        %1222 = vmatprep.subr.mxu0 0.0
        %1223 = vmatpush1.xpose.msra.mxu0 0.0
        %1224 = vmatprep.subr.mxu0 0.0
        %1225 = vmatpush1.xpose.msra.mxu0 0.0
        %1226 = vmatprep.subr.mxu0 0.0
        %1227 = vmatpush1.xpose.msra.mxu0 0.0
        %1228 = vmatprep.subr.mxu0 0.0
        %1229 = vmatpush1.xpose.msra.mxu0 0.0
        %1230 = vmatprep.subr.mxu0 0.0
        %1231 = vmatpush1.xpose.msra.mxu0 0.0
        %1232 = vmatprep.subr.mxu0 0.0
        %1233 = vmatpush1.xpose.msra.mxu0 0.0
        %1234 = vmatprep.subr.mxu0 0.0
        %1235 = vmatpush1.xpose.msra.mxu0 0.0
        %1236 = vmatprep.subr.mxu0 0.0
        %1237 = vmatpush1.xpose.msra.mxu0 0.0
        %1238 = vmatprep.subr.mxu0 0.0
        %1239 = vmatpush1.xpose.msra.mxu0 0.0
        %1240 = vmatprep.subr.mxu0 0.0
        %1241 = vmatpush1.xpose.msra.mxu0 0.0
        %1242 = vmatprep.subr.mxu0 0.0
        %1243 = vmatpush1.xpose.msra.mxu0 0.0
        %1244 = vmatprep.subr.mxu0 0.0
        %1245 = vmatpush1.xpose.msra.mxu0 0.0
        %1246 = vmatprep.subr.mxu0 0.0
        %1247 = vmatpush1.xpose.msra.mxu0 0.0
        %1248 = vmatprep.subr.mxu0 0.0
        %1249 = vmatpush1.xpose.msra.mxu0 0.0
        %1250 = vmatprep.mubr.f32.mxu0 0.0
        %1251 = vmatmul.mubr.f32.gmra.mrb[0].mxu0 %v1182
        %v1252 = vpop.f32.mrb[0].mxu0
        %v1253 = vadd.f32 %v464, %v1252
        %v1254 = vpop.f32.mrb[0].mxu0
        %1255 = vdwg.mxu0
        %v1256 = vsel %vm465, %v1253, -inf
        %1257 = vmax.xlane.f32.xlu0 %v1256
        %v1258 = vpop.xlane.xlu0 %1257
        %v1259 = vsub.f32 %v1253, %v1258
        %v1260 = vmul.f32 %v1259, 1.442695
        %v1261 = vpow.pop %v1260
        %v1262 = vsel %vm465, %v1261, 0.0
        %1263 = vadd.xlane.f32.xlu0 %v1262
        %v1264 = vpop.xlane.xlu0 %1263
        %v1265 = vrcp.pop %v1264
        %v1266 = vmul.f32 %v1261, %v1265
        %1267 = vrot.lane.b32.xlu0 %v451, 40
        %v1268 = vpop.permute.xlu0 %1267
        %v1271 = vsel %vm465, %v1266, 0
        %1273 = vmatprep.subr.mxu0 0.0
        %1274 = vmatpush1.msra.mxu0 %v1268
        %1275 = vmatprep.subr.mxu0 0.0
        %1276 = vmatpush1.msra.mxu0 0.0
        %1277 = vmatprep.subr.mxu0 0.0
        %1278 = vmatpush1.msra.mxu0 0.0
        %1279 = vmatprep.subr.mxu0 0.0
        %1280 = vmatpush1.msra.mxu0 0.0
        %1281 = vmatprep.subr.mxu0 0.0
        %1282 = vmatpush1.msra.mxu0 0.0
        %1283 = vmatprep.subr.mxu0 0.0
        %1284 = vmatpush1.msra.mxu0 0.0
        %1285 = vmatprep.subr.mxu0 0.0
        %1286 = vmatpush1.msra.mxu0 0.0
        %1287 = vmatprep.subr.mxu0 0.0
        %1288 = vmatpush1.msra.mxu0 0.0
        %1289 = vmatprep.subr.mxu0 0.0
        %1290 = vmatpush1.msra.mxu0 0.0
        %1291 = vmatprep.subr.mxu0 0.0
        %1292 = vmatpush1.msra.mxu0 0.0
        %1293 = vmatprep.subr.mxu0 0.0
        %1294 = vmatpush1.msra.mxu0 0.0
        %1295 = vmatprep.subr.mxu0 0.0
        %1296 = vmatpush1.msra.mxu0 0.0
        %1297 = vmatprep.subr.mxu0 0.0
        %1298 = vmatpush1.msra.mxu0 0.0
        %1299 = vmatprep.subr.mxu0 0.0
        %1300 = vmatpush1.msra.mxu0 0.0
        %1301 = vmatprep.subr.mxu0 0.0
        %1302 = vmatpush1.msra.mxu0 0.0
        %1303 = vmatprep.subr.mxu0 0.0
        %1304 = vmatpush1.msra.mxu0 0.0
        %1305 = vmatprep.subr.mxu0 0.0
        %1306 = vmatpush1.msra.mxu0 0.0
        %1307 = vmatprep.subr.mxu0 0.0
        %1308 = vmatpush1.msra.mxu0 0.0
        %1309 = vmatprep.subr.mxu0 0.0
        %1310 = vmatpush1.msra.mxu0 0.0
        %1311 = vmatprep.subr.mxu0 0.0
        %1312 = vmatpush1.msra.mxu0 0.0
        %1313 = vmatprep.subr.mxu0 0.0
        %1314 = vmatpush1.msra.mxu0 0.0
        %1315 = vmatprep.subr.mxu0 0.0
        %1316 = vmatpush1.msra.mxu0 0.0
        %1317 = vmatprep.subr.mxu0 0.0
        %1318 = vmatpush1.msra.mxu0 0.0
        %1319 = vmatprep.subr.mxu0 0.0
        %1320 = vmatpush1.msra.mxu0 0.0
        %1321 = vmatprep.subr.mxu0 0.0
        %1322 = vmatpush1.msra.mxu0 0.0
        %1323 = vmatprep.subr.mxu0 0.0
        %1324 = vmatpush1.msra.mxu0 0.0
        %1325 = vmatprep.subr.mxu0 0.0
        %1326 = vmatpush1.msra.mxu0 0.0
        %1327 = vmatprep.subr.mxu0 0.0
        %1328 = vmatpush1.msra.mxu0 0.0
        %1329 = vmatprep.subr.mxu0 0.0
        %1330 = vmatpush1.msra.mxu0 0.0
        %1331 = vmatprep.subr.mxu0 0.0
        %1332 = vmatpush1.msra.mxu0 0.0
        %1333 = vmatprep.subr.mxu0 0.0
        %1334 = vmatpush1.msra.mxu0 0.0
        %1335 = vmatprep.subr.mxu0 0.0
        %1336 = vmatpush1.msra.mxu0 0.0
        %1337 = vmatprep.mubr.f32.mxu0 0.0
        %1338 = vmatmul.mubr.f32.gmra.mrb[0].mxu0 %v1271
        %v1339 = vpop.f32.mrb[0].mxu0
        %v1340 = vadd.f32 0.0, %v1339
        %v1341 = vpop.f32.mrb[0].mxu0
        %1342 = vdwg.mxu0
        %v1343 = vld [vmem:[#allocation7 + $0x18] sm:$0xff]
        %v1345 = vsel %vm465, %v1340, 0
        %1347 = vmatprep.subr.mxu0 0.0
        %1348 = vmatpush1.msra.mxu0 %v1343
        %1349 = vmatprep.subr.mxu0 0.0
        %1350 = vmatpush1.msra.mxu0 0.0
        %1351 = vmatprep.subr.mxu0 0.0
        %1352 = vmatpush1.msra.mxu0 0.0
        %1353 = vmatprep.subr.mxu0 0.0
        %1354 = vmatpush1.msra.mxu0 0.0
        %1355 = vmatprep.subr.mxu0 0.0
        %1356 = vmatpush1.msra.mxu0 0.0
        %1357 = vmatprep.subr.mxu0 0.0
        %1358 = vmatpush1.msra.mxu0 0.0
        %1359 = vmatprep.subr.mxu0 0.0
        %1360 = vmatpush1.msra.mxu0 0.0
        %1361 = vmatprep.subr.mxu0 0.0
        %1362 = vmatpush1.msra.mxu0 0.0
        %1363 = vmatprep.subr.mxu0 0.0
        %1364 = vmatpush1.msra.mxu0 0.0
        %1365 = vmatprep.subr.mxu0 0.0
        %1366 = vmatpush1.msra.mxu0 0.0
        %1367 = vmatprep.subr.mxu0 0.0
        %1368 = vmatpush1.msra.mxu0 0.0
        %1369 = vmatprep.subr.mxu0 0.0
        %1370 = vmatpush1.msra.mxu0 0.0
        %1371 = vmatprep.subr.mxu0 0.0
        %1372 = vmatpush1.msra.mxu0 0.0
        %1373 = vmatprep.subr.mxu0 0.0
        %1374 = vmatpush1.msra.mxu0 0.0
        %1375 = vmatprep.subr.mxu0 0.0
        %1376 = vmatpush1.msra.mxu0 0.0
        %1377 = vmatprep.subr.mxu0 0.0
        %1378 = vmatpush1.msra.mxu0 0.0
        %1379 = vmatprep.subr.mxu0 0.0
        %1380 = vmatpush1.msra.mxu0 0.0
        %1381 = vmatprep.subr.mxu0 0.0
        %1382 = vmatpush1.msra.mxu0 0.0
        %1383 = vmatprep.subr.mxu0 0.0
        %1384 = vmatpush1.msra.mxu0 0.0
        %1385 = vmatprep.subr.mxu0 0.0
        %1386 = vmatpush1.msra.mxu0 0.0
        %1387 = vmatprep.subr.mxu0 0.0
        %1388 = vmatpush1.msra.mxu0 0.0
        %1389 = vmatprep.subr.mxu0 0.0
        %1390 = vmatpush1.msra.mxu0 0.0
        %1391 = vmatprep.subr.mxu0 0.0
        %1392 = vmatpush1.msra.mxu0 0.0
        %1393 = vmatprep.subr.mxu0 0.0
        %1394 = vmatpush1.msra.mxu0 0.0
        %1395 = vmatprep.subr.mxu0 0.0
        %1396 = vmatpush1.msra.mxu0 0.0
        %1397 = vmatprep.subr.mxu0 0.0
        %1398 = vmatpush1.msra.mxu0 0.0
        %1399 = vmatprep.subr.mxu0 0.0
        %1400 = vmatpush1.msra.mxu0 0.0
        %1401 = vmatprep.subr.mxu0 0.0
        %1402 = vmatpush1.msra.mxu0 0.0
        %1403 = vmatprep.subr.mxu0 0.0
        %1404 = vmatpush1.msra.mxu0 0.0
        %1405 = vmatprep.subr.mxu0 0.0
        %1406 = vmatpush1.msra.mxu0 0.0
        %1407 = vmatprep.subr.mxu0 0.0
        %1408 = vmatpush1.msra.mxu0 0.0
        %1409 = vmatprep.subr.mxu0 0.0
        %1410 = vmatpush1.msra.mxu0 0.0
        %1411 = vmatprep.mubr.f32.mxu0 0.0
        %1412 = vmatmul.mubr.f32.gmra.mrb[0].mxu0 %v1345
        %v1413 = vpop.f32.mrb[0].mxu0
        %v1414 = vadd.f32 0.0, %v1413
        %v1415 = vpop.f32.mrb[0].mxu0
        %1416 = vdwg.mxu0
        %v1417 = vadd.f32 %v1177, %v1414
        %v1418 = vld [vmem:[%s4] sm:$0x1]
        %v1420 = vlaneseq
        %v1421 = vshrl.u32 %v1420, 7
        %v1422 = vsub.s32 0, %v1421
        %v1423 = vrot.slane %v1418, %v1422
        %v1425 = vadd.f32 %v1417, %v1423
        %1426 = vst.msk [vmem:[%s353] sm:$0xff] %vm380, %v1425
        %s1427 = sand.u32 %s169, 1
        %s1428 = scalar_lea.sflag [#allocation4], %s1427
        %s1429 = sand.u32 %s169, 1
        %s1430 = smul.addr %s1429, 8
        %s1431 = scalar_lea.vmem [#allocation8], %s1430
        %s1432 = sand.u32 %s30, 1
        %s1433 = scalar_lea.sflag [#allocation10], %s1432
        %s1434 = sand.u32 %s195, 1
        %s1435 = smul.addr %s1434, 8
        %s1436 = scalar_lea.vmem [#allocation9], %s1435
        %s1437 = sand.u32 %s30, 1
        %s1438 = scalar_lea.sflag [#allocation10], %s1437
        %s1439 = sand.u32 %s221, 1
        %s1440 = smul.addr %s1439, 8
        %s1441 = scalar_lea.vmem [#allocation11], %s1440
        // Predicated region
        $region57: #{tpu_custom_call.1} parent=43 // pred_check
          %p1442 = pneg %p179
        $region58: #{tpu_custom_call.1} parent=43 // pred_check_branch
          %1444 = sbr.rel (%p1442) target = $region60
        $region59: #{tpu_custom_call.1} parent=43 // pred_region
          %s1446 = ssub.s32 128, 128
          %1447 = vsyncadd %s1428, %s1446
          %s1448 = smul.addr %s30, 128
          %s1449 = scalar_lea.hbm %s6, %s1448
          %s1451 = sshll.u32 %s1431, 4
          %s1452 = int_to_ptr.vmem [resolvable:$true] %s1451
          %1454 = dma.vmem_to_hbm [thread:$0]  %s1452, 128, %s1449, %s1428
        $region60: #{tpu_custom_call.1} parent=43 // pred_fallthru
          _
        // Predicated region
        $region61: #{tpu_custom_call.1} parent=43 // pred_check
          %p1455 = pneg %p205
        $region62: #{tpu_custom_call.1} parent=43 // pred_check_branch
          %1457 = sbr.rel (%p1455) target = $region64
        $region63: #{tpu_custom_call.1} parent=43 // pred_region
          %s1459 = ssub.s32 128, 128
          %1460 = vsyncadd %s1433, %s1459
          %s1461 = smul.addr %s30, 128
          %s1462 = scalar_lea.hbm %s7, %s1461
          %s1464 = sshll.u32 %s1436, 4
          %s1465 = int_to_ptr.vmem [resolvable:$true] %s1464
          %1467 = dma.vmem_to_hbm [thread:$0]  %s1465, 128, %s1462, %s1433
        $region64: #{tpu_custom_call.1} parent=43 // pred_fallthru
          _
        // Predicated region
        $region65: #{tpu_custom_call.1} parent=43 // pred_check
          %p1468 = pneg %p231
        $region66: #{tpu_custom_call.1} parent=43 // pred_check_branch
          %1470 = sbr.rel (%p1468) target = $region68
        $region67: #{tpu_custom_call.1} parent=43 // pred_region
          %s1472 = ssub.s32 128, 128
          %1473 = vsyncadd %s1438, %s1472
          %s1474 = smul.addr %s30, 128
          %s1475 = scalar_lea.hbm %s8, %s1474
          %s1477 = sshll.u32 %s1441, 4
          %s1478 = int_to_ptr.vmem [resolvable:$true] %s1477
          %1480 = dma.vmem_to_hbm [thread:$0]  %s1478, 128, %s1475, %s1438
        $region68: #{tpu_custom_call.1} parent=43 // pred_fallthru
          _
      $region44: #{tpu_custom_call.1} parent=5 // pred_fallthru
        _
      %p1481 = scmp.le.s32.totalorder 2, %s25
      // Predicated region
      $region69: #{tpu_custom_call.1} parent=5 // pred_check
        %p1482 = pneg %p1481
      $region70: #{tpu_custom_call.1} parent=5 // pred_check_branch
        %1484 = sbr.rel (%p1482) target = $region72
      $region71: #{tpu_custom_call.1} parent=5 // pred_region
        %s1485 = ssub.s32 %s25, 2
        // Predicated region
        $region73: #{tpu_custom_call.1} parent=71 // pred_check
          %p1486 = pneg %p185
        $region74: #{tpu_custom_call.1} parent=71 // pred_check_branch
          %1488 = sbr.rel (%p1486) target = $region76
        $region75: #{tpu_custom_call.1} parent=71 // pred_region
          %s1489 = sand.u32 %s170, 1
          %s1490 = scalar_lea.sflag [#allocation4], %s1489
          %s1491 = sand.u32 %s170, 1
          %s1492 = smul.addr %s1491, 8
          %s1493 = scalar_lea.vmem [#allocation8], %s1492
          %1494 = dma.done %s1490, 128
        $region76: #{tpu_custom_call.1} parent=71 // pred_fallthru
          _
        // Predicated region
        $region77: #{tpu_custom_call.1} parent=71 // pred_check
          %p1495 = pneg %p211
        $region78: #{tpu_custom_call.1} parent=71 // pred_check_branch
          %1497 = sbr.rel (%p1495) target = $region80
        $region79: #{tpu_custom_call.1} parent=71 // pred_region
          %s1498 = sand.u32 %s31, 1
          %s1499 = scalar_lea.sflag [#allocation10], %s1498
          %s1500 = sand.u32 %s196, 1
          %s1501 = smul.addr %s1500, 8
          %s1502 = scalar_lea.vmem [#allocation9], %s1501
          %1503 = dma.done %s1499, 128
        $region80: #{tpu_custom_call.1} parent=71 // pred_fallthru
          _
        // Predicated region
        $region81: #{tpu_custom_call.1} parent=71 // pred_check
          %p1504 = pneg %p237
        $region82: #{tpu_custom_call.1} parent=71 // pred_check_branch
          %1506 = sbr.rel (%p1504) target = $region84
        $region83: #{tpu_custom_call.1} parent=71 // pred_region
          %s1507 = sand.u32 %s31, 1
          %s1508 = scalar_lea.sflag [#allocation10], %s1507
          %s1509 = sand.u32 %s222, 1
          %s1510 = smul.addr %s1509, 8
          %s1511 = scalar_lea.vmem [#allocation11], %s1510
          %1512 = dma.done %s1508, 128
        $region84: #{tpu_custom_call.1} parent=71 // pred_fallthru
          _
      $region72: #{tpu_custom_call.1} parent=5 // pred_fallthru
        _
    $region6: #{tpu_custom_call.1} parent=1 // loop_footer
      %s29 = sadd.s32 1, %s25
    $region7: #{tpu_custom_call.1} parent=1 // loop_footer_branch
      %24 = sbr.rel target = $region3
    $region8: #{tpu_custom_call.1} parent=1 // loop_exit
      _
    %1513 = vsyncpa [#allocation3], 1
    %s1514 = scalar_lea.sflag [#allocation3], 1
    %1515 = vsyncpa %s1514, 1
    %1516 = vsyncpa [#allocation6], 1
    %1517 = vsyncpa [#allocation4], 1
    %s1518 = scalar_lea.sflag [#allocation4], 1
    %1519 = vsyncpa %s1518, 1
    %1520 = vsyncpa [#allocation10], 1
    %s1521 = scalar_lea.sflag [#allocation10], 1
    %1522 = vsyncpa %s1521, 1

</llo_original>
